<compile_context>
chip_gen: v7x
topology: tpu7x:2x2x1
jax: 0.10.0
libtpu: 0.0.40
codegen_flags: <defaults>
</compile_context>

<pallas_src>
import jax
import jax.numpy as jnp
from jax import lax
from jax.experimental import pallas as pl
from jax.experimental.pallas import tpu as pltpu

DIM = 128          # hebbian layer width
BATCH = 8          # batch size (sublane aligned)
STEPS = 4          # fused recurrent steps per pallas_call
LN_EPS = 1e-5      # torch.nn.LayerNorm default eps
NORM_EPS = 1e-12   # torch.nn.functional.normalize default eps
ALPHA_INIT = 0.1
DECAY_INIT = 0.01


def _layernorm(x, gamma, beta):
    # Two-pass statistics (matches PyTorch LayerNorm; avoids E[x^2]-E[x]^2
    # cancellation drift over a long recurrence).
    m = jnp.mean(x, axis=-1, keepdims=True)
    d = x - m
    var = jnp.mean(d * d, axis=-1, keepdims=True)
    return d * lax.rsqrt(var + LN_EPS) * gamma + beta


def hebbian_kernel(params_ref, omd_ref, ones_ref, stim_ref,
                   w_heb0_ref, w_rec0_ref, prev0_ref,
                   act_ref, w_heb_out_ref, w_rec_out_ref,
                   w_heb_scr, w_rec_scr, prev_scr):
    t = pl.program_id(0)
    n_steps = pl.num_programs(0)

    # ---- step 0: pull initial state into resident VMEM scratch ------------
    @pl.when(t == 0)
    def _init():
        w_heb_scr[...] = w_heb0_ref[...]
        w_rec_scr[...] = w_rec0_ref[...]
        prev_scr[...] = prev0_ref[...]

    # packed parameter rows: [alpha, g_rec, b_rec, g_act, b_act, 0, 0, 0]
    alpha = params_ref[0:1, :]   # [1, D] column-wise modulation of updates
    g_rec = params_ref[1:2, :]
    b_rec = params_ref[2:3, :]
    g_act = params_ref[3:4, :]
    b_act = params_ref[4:5, :]

    stim = stim_ref[...]         # [B, D] current step's stimulus
    prev = prev_scr[...]         # [B, D] previous activation (recurrent state)
    w_heb = w_heb_scr[...]       # [D, D]
    w_rec = w_rec_scr[...]       # [D, D]

    # ---- forward ----------------------------------------------------------
    rec_out = jnp.dot(prev, w_rec, preferred_element_type=jnp.float32)
    rec_norm = _layernorm(rec_out, g_rec, b_rec)
    stim_out = jnp.dot(stim, w_heb, preferred_element_type=jnp.float32)
    final = jnp.maximum(stim_out + rec_norm, 0.0)
    final_norm = _layernorm(final, g_act, b_act)

    act_ref[...] = final_norm            # per-step output (lane-dense slab)
    prev_scr[...] = final_norm           # becomes next step's prev_act

    # ---- Hebbian plasticity update -----------------------------------------
    # einsum('bi,bj->ij', X, Y) == X^T @ Y via batch-dim contraction on MXU.
    dn = (((0,), (0,)), ((), ()))
    heb_upd = lax.dot_general(stim, stim_out, dn,
                              preferred_element_type=jnp.float32)   # [D, D]
    rec_upd = lax.dot_general(prev, rec_out, dn,
                              preferred_element_type=jnp.float32)   # [D, D]

    omd = omd_ref[...]                   # (1 - decay[:, None]) pre-broadcast
    new_heb = w_heb * omd + heb_upd * alpha
    new_rec = w_rec * omd + rec_upd * alpha

    # Row L2 normalize: sum-of-squares on the MXU (lane-broadcast result),
    # EUP rsqrt, single multiply.  rsqrt(max(ss, eps^2)) == 1/max(||row||, eps).
    ones_mat = ones_ref[...]
    heb_ss = jnp.dot(new_heb * new_heb, ones_mat,
                     preferred_element_type=jnp.float32)
    rec_ss = jnp.dot(new_rec * new_rec, ones_mat,
                     preferred_element_type=jnp.float32)
    w_heb_scr[...] = new_heb * lax.rsqrt(jnp.maximum(heb_ss, NORM_EPS * NORM_EPS))
    w_rec_scr[...] = new_rec * lax.rsqrt(jnp.maximum(rec_ss, NORM_EPS * NORM_EPS))

    # ---- last step: write final weight state back to HBM ------------------
    @pl.when(t == n_steps - 1)
    def _finalize():
        w_heb_out_ref[...] = w_heb_scr[...]
        w_rec_out_ref[...] = w_rec_scr[...]


@jax.jit
def hebbian_rollout(stimuli, prev0, w_heb, w_rec,
                    alpha, decay, g_rec, b_rec, g_act, b_act):
    """T fused HebbianLayer steps.

    Returns (activations[T,B,D], final_W_heb[D,D], final_W_rec[D,D]).
    """
    T, B, D = stimuli.shape

    # Pack the tiny per-feature parameter vectors into one (8, D) slab.
    params = jnp.zeros((8, D), jnp.float32)
    params = (params.at[0].set(alpha)
                    .at[1].set(g_rec).at[2].set(b_rec)
                    .at[3].set(g_act).at[4].set(b_act))
    # Pre-broadcast (1 - decay) along rows so the kernel needs no lane bcast.
    omd = jnp.broadcast_to((1.0 - decay).astype(jnp.float32)[:, None], (D, D))
    ones_mat = jnp.ones((D, D), jnp.float32)   # MXU row-reduction operand

    full_dd = pl.BlockSpec((D, D), lambda t: (0, 0))
    full_bd = pl.BlockSpec((B, D), lambda t: (0, 0))
    full_p = pl.BlockSpec((8, D), lambda t: (0, 0))
    step_bd = pl.BlockSpec((None, B, D), lambda t: (t, 0, 0))   # streamed over t

    out_shape = (
        jax.ShapeDtypeStruct((T, B, D), jnp.float32),   # per-step activations
        jax.ShapeDtypeStruct((D, D), jnp.float32),      # final hebbian weights
        jax.ShapeDtypeStruct((D, D), jnp.float32),      # final recurrent weights
    )

    return pl.pallas_call(
        hebbian_kernel,
        out_shape=out_shape,
        grid_spec=pltpu.PrefetchScalarGridSpec(
            num_scalar_prefetch=0,
            grid=(T,),
            in_specs=[full_p, full_dd, full_dd, step_bd,
                      full_dd, full_dd, full_bd],
            out_specs=(step_bd, full_dd, full_dd),
            scratch_shapes=[pltpu.VMEM((D, D), jnp.float32),   # W_heb state
                            pltpu.VMEM((D, D), jnp.float32),   # W_rec state
                            pltpu.VMEM((B, D), jnp.float32)],  # prev activation
        ),
        compiler_params=pltpu.CompilerParams(
            # Recurrent chain -> the time axis is strictly sequential.
            dimension_semantics=("arbitrary",)),
    )(params, omd, ones_mat, stimuli, w_heb, w_rec, prev0)


# ----------------------------------------------------------------------------
# Pure-JAX reference (mirrors the PyTorch module line-by-line).
# ----------------------------------------------------------------------------
def _ref_ln(x, g, b):
    m = jnp.mean(x, axis=-1, keepdims=True)
    v = jnp.mean((x - m) ** 2, axis=-1, keepdims=True)
    return (x - m) / jnp.sqrt(v + LN_EPS) * g + b


def reference_step(stimulus, prev, w_heb, w_rec,
                   alpha, decay, g_rec, b_rec, g_act, b_act):
    hp = lax.Precision.HIGHEST
    rec_out = jnp.dot(prev, w_rec, precision=hp)
    rec_norm = _ref_ln(rec_out, g_rec, b_rec)
    stim_out = jnp.dot(stimulus, w_heb, precision=hp)
    final = jax.nn.relu(stim_out + rec_norm)
    final_norm = _ref_ln(final, g_act, b_act)

    heb_upd = jnp.einsum('bi,bj->ij', stimulus, stim_out, precision=hp)
    rec_upd = jnp.einsum('bi,bj->ij', prev, rec_out, precision=hp)
    new_heb = w_heb + heb_upd * alpha[None, :] - decay[:, None] * w_heb
    new_rec = w_rec + rec_upd * alpha[None, :] - decay[:, None] * w_rec
    new_heb = new_heb / jnp.maximum(
        jnp.linalg.norm(new_heb, axis=1, keepdims=True), NORM_EPS)
    new_rec = new_rec / jnp.maximum(
        jnp.linalg.norm(new_rec, axis=1, keepdims=True), NORM_EPS)
    return final_norm, new_heb, new_rec


if __name__ == "__main__":
    key = jax.random.PRNGKey(0)
    k1, k2, k3 = jax.random.split(key, 3)

    B, D, T = BATCH, DIM, STEPS
    stimuli = jax.random.normal(k1, (T, B, D), jnp.float32)
    w_heb0 = jax.random.normal(k2, (D, D), jnp.float32)   # torch.randn(dim, dim)
    w_rec0 = jax.random.normal(k3, (D, D), jnp.float32)
    alpha = jnp.full((D,), ALPHA_INIT, jnp.float32)
    decay = jnp.full((D,), DECAY_INIT, jnp.float32)
    g_rec = jnp.ones((D,), jnp.float32)
    b_rec = jnp.zeros((D,), jnp.float32)
    g_act = jnp.ones((D,), jnp.float32)
    b_act = jnp.zeros((D,), jnp.float32)

    # First call: previous_activation is None -> zeros (matches PyTorch).
    prev0 = jnp.zeros((B, D), jnp.float32)
    ln_params = (g_rec, b_rec, g_act, b_act)

    # T fused recurrent steps in ONE pallas_call.
    acts, w_heb_f, w_rec_f = hebbian_rollout(
        stimuli, prev0, w_heb0, w_rec0, alpha, decay, *ln_params)
    jax.block_until_ready((acts, w_heb_f, w_rec_f))

    # Reference trajectory (step-by-step).
    prev_r, wh_r, wr_r = prev0, w_heb0, w_rec0
    ref_acts = []
    for t in range(T):
        prev_r, wh_r, wr_r = reference_step(
            stimuli[t], prev_r, wh_r, wr_r, alpha, decay, *ln_params)
        ref_acts.append(prev_r)
    ref_acts = jnp.stack(ref_acts, axis=0)

    checks = [(acts, ref_acts), (w_heb_f, wh_r), (w_rec_f, wr_r)]
    for got, want in checks:
        assert got.shape == want.shape
        assert bool(jnp.all(jnp.isfinite(got)))
        assert jnp.allclose(got, want, atol=1e-2, rtol=1e-2)

    # Row norms of the updated weights must be 1 (F.normalize semantics).
    assert jnp.allclose(jnp.linalg.norm(w_heb_f, axis=1), 1.0, atol=1e-3)
    assert jnp.allclose(jnp.linalg.norm(w_rec_f, axis=1), 1.0, atol=1e-3)

    print("KERNEL_OK")
</pallas_src>

<mosaic_0001>
module attributes {stable_mosaic.version = 11 : i64} {
  func.func @hebbian_kernel(%arg0: i32, %arg1: memref<8x128xf32, #tpu.memory_space<vmem>>, %arg2: memref<128x128xf32, #tpu.memory_space<vmem>>, %arg3: memref<128x128xf32, #tpu.memory_space<vmem>>, %arg4: memref<1x8x128xf32, #tpu.memory_space<vmem>>, %arg5: memref<128x128xf32, #tpu.memory_space<vmem>>, %arg6: memref<128x128xf32, #tpu.memory_space<vmem>>, %arg7: memref<8x128xf32, #tpu.memory_space<vmem>>, %arg8: memref<1x8x128xf32, #tpu.memory_space<vmem>>, %arg9: memref<128x128xf32, #tpu.memory_space<vmem>>, %arg10: memref<128x128xf32, #tpu.memory_space<vmem>>, %arg11: memref<128x128xf32, #tpu.memory_space<vmem>>, %arg12: memref<128x128xf32, #tpu.memory_space<vmem>>, %arg13: memref<8x128xf32, #tpu.memory_space<vmem>>) attributes {dimension_semantics = [#tpu.dimension_semantics<arbitrary>], iteration_bounds = array<i64: 4>, scalar_prefetch = 0 : i64, scratch_operands = 3 : i64, tpu.core_type = #tpu.core_type<tc>, window_params = [{pipeline_mode = #tpu.pipeline_mode<synchronous>, transform_indices = @transform_0, window_bounds = array<i64: 8, 128>}, {pipeline_mode = #tpu.pipeline_mode<synchronous>, transform_indices = @transform_1, window_bounds = array<i64: 128, 128>}, {pipeline_mode = #tpu.pipeline_mode<synchronous>, transform_indices = @transform_2, window_bounds = array<i64: 128, 128>}, {transform_indices = @transform_3, window_bounds = array<i64: 1, 8, 128>}, {pipeline_mode = #tpu.pipeline_mode<synchronous>, transform_indices = @transform_4, window_bounds = array<i64: 128, 128>}, {pipeline_mode = #tpu.pipeline_mode<synchronous>, transform_indices = @transform_5, window_bounds = array<i64: 128, 128>}, {pipeline_mode = #tpu.pipeline_mode<synchronous>, transform_indices = @transform_6, window_bounds = array<i64: 8, 128>}, {transform_indices = @transform_7, window_bounds = array<i64: 1, 8, 128>}, {pipeline_mode = #tpu.pipeline_mode<synchronous>, transform_indices = @transform_8, window_bounds = array<i64: 128, 128>}, {pipeline_mode = #tpu.pipeline_mode<synchronous>, transform_indices = @transform_9, window_bounds = array<i64: 128, 128>}]} {
    %c0_i32 = arith.constant 0 : i32
    %0 = arith.cmpi eq, %arg0, %c0_i32 : i32
    %1 = arith.extui %0 : i1 to i32
    %c0_i32_0 = arith.constant 0 : i32
    %2 = arith.cmpi ne, %1, %c0_i32_0 : i32
    scf.if %2 {
      %c0_47 = arith.constant 0 : index
      %c0_48 = arith.constant 0 : index
      %91 = vector.load %arg5[%c0_47, %c0_48] : memref<128x128xf32, #tpu.memory_space<vmem>>, vector<128x128xf32>
      %c0_49 = arith.constant 0 : index
      %c0_50 = arith.constant 0 : index
      %92 = vector.load %arg11[%c0_49, %c0_50] : memref<128x128xf32, #tpu.memory_space<vmem>>, vector<128x128xf32>
      tpu.vector_store %arg11[%c0_49, %c0_50], %91 {strides = array<i32>} : memref<128x128xf32, #tpu.memory_space<vmem>>, vector<128x128xf32>,
      %c0_51 = arith.constant 0 : index
      %c0_52 = arith.constant 0 : index
      %93 = vector.load %arg6[%c0_51, %c0_52] : memref<128x128xf32, #tpu.memory_space<vmem>>, vector<128x128xf32>
      %c0_53 = arith.constant 0 : index
      %c0_54 = arith.constant 0 : index
      %94 = vector.load %arg12[%c0_53, %c0_54] : memref<128x128xf32, #tpu.memory_space<vmem>>, vector<128x128xf32>
      tpu.vector_store %arg12[%c0_53, %c0_54], %93 {strides = array<i32>} : memref<128x128xf32, #tpu.memory_space<vmem>>, vector<128x128xf32>,
      %c0_55 = arith.constant 0 : index
      %c0_56 = arith.constant 0 : index
      %95 = vector.load %arg7[%c0_55, %c0_56] : memref<8x128xf32, #tpu.memory_space<vmem>>, vector<8x128xf32>
      %c0_57 = arith.constant 0 : index
      %c0_58 = arith.constant 0 : index
      %96 = vector.load %arg13[%c0_57, %c0_58] : memref<8x128xf32, #tpu.memory_space<vmem>>, vector<8x128xf32>
      tpu.vector_store %arg13[%c0_57, %c0_58], %95 {strides = array<i32>} : memref<8x128xf32, #tpu.memory_space<vmem>>, vector<8x128xf32>,
    } else {
    }
    %c0 = arith.constant 0 : index
    %c0_1 = arith.constant 0 : index
    %3 = vector.load %arg1[%c0, %c0_1] : memref<8x128xf32, #tpu.memory_space<vmem>>, vector<1x128xf32>
    %c1 = arith.constant 1 : index
    %c0_2 = arith.constant 0 : index
    %4 = vector.load %arg1[%c1, %c0_2] : memref<8x128xf32, #tpu.memory_space<vmem>>, vector<1x128xf32>
    %c2 = arith.constant 2 : index
    %c0_3 = arith.constant 0 : index
    %5 = vector.load %arg1[%c2, %c0_3] : memref<8x128xf32, #tpu.memory_space<vmem>>, vector<1x128xf32>
    %c3 = arith.constant 3 : index
    %c0_4 = arith.constant 0 : index
    %6 = vector.load %arg1[%c3, %c0_4] : memref<8x128xf32, #tpu.memory_space<vmem>>, vector<1x128xf32>
    %c4 = arith.constant 4 : index
    %c0_5 = arith.constant 0 : index
    %7 = vector.load %arg1[%c4, %c0_5] : memref<8x128xf32, #tpu.memory_space<vmem>>, vector<1x128xf32>
    %c0_6 = arith.constant 0 : index
    %c0_7 = arith.constant 0 : index
    %c0_8 = arith.constant 0 : index
    %8 = vector.load %arg4[%c0_6, %c0_7, %c0_8] : memref<1x8x128xf32, #tpu.memory_space<vmem>>, vector<1x8x128xf32>
    %9 = vector.shape_cast %8 : vector<1x8x128xf32> to vector<8x128xf32>
    %c0_9 = arith.constant 0 : index
    %c0_10 = arith.constant 0 : index
    %10 = vector.load %arg13[%c0_9, %c0_10] : memref<8x128xf32, #tpu.memory_space<vmem>>, vector<8x128xf32>
    %c0_11 = arith.constant 0 : index
    %c0_12 = arith.constant 0 : index
    %11 = vector.load %arg11[%c0_11, %c0_12] : memref<128x128xf32, #tpu.memory_space<vmem>>, vector<128x128xf32>
    %c0_13 = arith.constant 0 : index
    %c0_14 = arith.constant 0 : index
    %12 = vector.load %arg12[%c0_13, %c0_14] : memref<128x128xf32, #tpu.memory_space<vmem>>, vector<128x128xf32>
    %cst = arith.constant dense<0.000000e+00> : vector<8x128xf32>
    %13 = tpu.matmul %10, %12, %cst {dimension_numbers = #tpu.dot_dimension_numbers<[1], [0], [0], [1], [0, 0, 1, 1], [], []>} : vector<8x128xf32>, vector<128x128xf32>, vector<8x128xf32> -> vector<8x128xf32>
    %cst_15 = arith.constant dense<0.000000e+00> : vector<8xf32>
    %14 = vector.multi_reduction <add>, %13, %cst_15 [1] : vector<8x128xf32> to vector<8xf32>
    %15 = vector.shape_cast %14 : vector<8xf32> to vector<8x1xf32>
    %cst_16 = arith.constant 1.280000e+02 : f32
    %16 = vector.broadcast %cst_16 : f32 to vector<8x1xf32>
    %17 = arith.divf %15, %16 : vector<8x1xf32>
    %18 = vector.broadcast %17 : vector<8x1xf32> to vector<8x128xf32>
    %19 = arith.subf %13, %18 : vector<8x128xf32>
    %20 = arith.mulf %19, %19 : vector<8x128xf32>
    %cst_17 = arith.constant dense<0.000000e+00> : vector<8xf32>
    %21 = vector.multi_reduction <add>, %20, %cst_17 [1] : vector<8x128xf32> to vector<8xf32>
    %22 = vector.shape_cast %21 : vector<8xf32> to vector<8x1xf32>
    %cst_18 = arith.constant 1.280000e+02 : f32
    %23 = vector.broadcast %cst_18 : f32 to vector<8x1xf32>
    %24 = arith.divf %22, %23 : vector<8x1xf32>
    %cst_19 = arith.constant 9.99999974E-6 : f32
    %25 = vector.broadcast %cst_19 : f32 to vector<8x1xf32>
    %26 = arith.addf %24, %25 : vector<8x1xf32>
    %27 = math.rsqrt %26 : vector<8x1xf32>
    %28 = vector.broadcast %27 : vector<8x1xf32> to vector<8x128xf32>
    %29 = arith.mulf %19, %28 : vector<8x128xf32>
    %30 = vector.broadcast %4 : vector<1x128xf32> to vector<8x128xf32>
    %31 = arith.mulf %29, %30 : vector<8x128xf32>
    %32 = vector.broadcast %5 : vector<1x128xf32> to vector<8x128xf32>
    %33 = arith.addf %31, %32 : vector<8x128xf32>
    %cst_20 = arith.constant dense<0.000000e+00> : vector<8x128xf32>
    %34 = tpu.matmul %9, %11, %cst_20 {dimension_numbers = #tpu.dot_dimension_numbers<[1], [0], [0], [1], [0, 0, 1, 1], [], []>} : vector<8x128xf32>, vector<128x128xf32>, vector<8x128xf32> -> vector<8x128xf32>
    %35 = arith.addf %34, %33 : vector<8x128xf32>
    %cst_21 = arith.constant 0.000000e+00 : f32
    %36 = vector.broadcast %cst_21 : f32 to vector<8x128xf32>
    %37 = arith.maximumf %35, %36 : vector<8x128xf32>
    %cst_22 = arith.constant dense<0.000000e+00> : vector<8xf32>
    %38 = vector.multi_reduction <add>, %37, %cst_22 [1] : vector<8x128xf32> to vector<8xf32>
    %39 = vector.shape_cast %38 : vector<8xf32> to vector<8x1xf32>
    %cst_23 = arith.constant 1.280000e+02 : f32
    %40 = vector.broadcast %cst_23 : f32 to vector<8x1xf32>
    %41 = arith.divf %39, %40 : vector<8x1xf32>
    %42 = vector.broadcast %41 : vector<8x1xf32> to vector<8x128xf32>
    %43 = arith.subf %37, %42 : vector<8x128xf32>
    %44 = arith.mulf %43, %43 : vector<8x128xf32>
    %cst_24 = arith.constant dense<0.000000e+00> : vector<8xf32>
    %45 = vector.multi_reduction <add>, %44, %cst_24 [1] : vector<8x128xf32> to vector<8xf32>
    %46 = vector.shape_cast %45 : vector<8xf32> to vector<8x1xf32>
    %cst_25 = arith.constant 1.280000e+02 : f32
    %47 = vector.broadcast %cst_25 : f32 to vector<8x1xf32>
    %48 = arith.divf %46, %47 : vector<8x1xf32>
    %cst_26 = arith.constant 9.99999974E-6 : f32
    %49 = vector.broadcast %cst_26 : f32 to vector<8x1xf32>
    %50 = arith.addf %48, %49 : vector<8x1xf32>
    %51 = math.rsqrt %50 : vector<8x1xf32>
    %52 = vector.broadcast %51 : vector<8x1xf32> to vector<8x128xf32>
    %53 = arith.mulf %43, %52 : vector<8x128xf32>
    %54 = vector.broadcast %6 : vector<1x128xf32> to vector<8x128xf32>
    %55 = arith.mulf %53, %54 : vector<8x128xf32>
    %56 = vector.broadcast %7 : vector<1x128xf32> to vector<8x128xf32>
    %57 = arith.addf %55, %56 : vector<8x128xf32>
    %c0_27 = arith.constant 0 : index
    %c0_28 = arith.constant 0 : index
    %c0_29 = arith.constant 0 : index
    %58 = vector.load %arg8[%c0_27, %c0_28, %c0_29] : memref<1x8x128xf32, #tpu.memory_space<vmem>>, vector<1x8x128xf32>
    %59 = vector.shape_cast %58 : vector<1x8x128xf32> to vector<8x128xf32>
    %60 = vector.shape_cast %57 : vector<8x128xf32> to vector<1x8x128xf32>
    tpu.vector_store %arg8[%c0_27, %c0_28, %c0_29], %60 {strides = array<i32>} : memref<1x8x128xf32, #tpu.memory_space<vmem>>, vector<1x8x128xf32>,
    %c0_30 = arith.constant 0 : index
    %c0_31 = arith.constant 0 : index
    %61 = vector.load %arg13[%c0_30, %c0_31] : memref<8x128xf32, #tpu.memory_space<vmem>>, vector<8x128xf32>
    tpu.vector_store %arg13[%c0_30, %c0_31], %57 {strides = array<i32>} : memref<8x128xf32, #tpu.memory_space<vmem>>, vector<8x128xf32>,
    %cst_32 = arith.constant dense<0.000000e+00> : vector<128x128xf32>
    %62 = tpu.matmul %9, %34, %cst_32 {dimension_numbers = #tpu.dot_dimension_numbers<[0], [0], [1], [1], [0, 1, 1, 1], [], []>} : vector<8x128xf32>, vector<8x128xf32>, vector<128x128xf32> -> vector<128x128xf32>
    %cst_33 = arith.constant dense<0.000000e+00> : vector<128x128xf32>
    %63 = tpu.matmul %10, %13, %cst_33 {dimension_numbers = #tpu.dot_dimension_numbers<[0], [0], [1], [1], [0, 1, 1, 1], [], []>} : vector<8x128xf32>, vector<8x128xf32>, vector<128x128xf32> -> vector<128x128xf32>
    %c0_34 = arith.constant 0 : index
    %c0_35 = arith.constant 0 : index
    %64 = vector.load %arg2[%c0_34, %c0_35] : memref<128x128xf32, #tpu.memory_space<vmem>>, vector<128x128xf32>
    %65 = arith.mulf %11, %64 : vector<128x128xf32>
    %66 = vector.broadcast %3 : vector<1x128xf32> to vector<128x128xf32>
    %67 = arith.mulf %62, %66 : vector<128x128xf32>
    %68 = arith.addf %65, %67 : vector<128x128xf32>
    %69 = arith.mulf %12, %64 : vector<128x128xf32>
    %70 = vector.broadcast %3 : vector<1x128xf32> to vector<128x128xf32>
    %71 = arith.mulf %63, %70 : vector<128x128xf32>
    %72 = arith.addf %69, %71 : vector<128x128xf32>
    %c0_36 = arith.constant 0 : index
    %c0_37 = arith.constant 0 : index
    %73 = vector.load %arg3[%c0_36, %c0_37] : memref<128x128xf32, #tpu.memory_space<vmem>>, vector<128x128xf32>
    %74 = arith.mulf %68, %68 : vector<128x128xf32>
    %cst_38 = arith.constant dense<0.000000e+00> : vector<128x128xf32>
    %75 = tpu.matmul %74, %73, %cst_38 {dimension_numbers = #tpu.dot_dimension_numbers<[1], [0], [0], [1], [0, 0, 1, 1], [], []>} : vector<128x128xf32>, vector<128x128xf32>, vector<128x128xf32> -> vector<128x128xf32>
    %76 = arith.mulf %72, %72 : vector<128x128xf32>
    %cst_39 = arith.constant dense<0.000000e+00> : vector<128x128xf32>
    %77 = tpu.matmul %76, %73, %cst_39 {dimension_numbers = #tpu.dot_dimension_numbers<[1], [0], [0], [1], [0, 0, 1, 1], [], []>} : vector<128x128xf32>, vector<128x128xf32>, vector<128x128xf32> -> vector<128x128xf32>
    %cst_40 = arith.constant 1.000000e-24 : f32
    %78 = vector.broadcast %cst_40 : f32 to vector<128x128xf32>
    %79 = arith.maximumf %75, %78 : vector<128x128xf32>
    %80 = math.rsqrt %79 : vector<128x128xf32>
    %81 = arith.mulf %68, %80 : vector<128x128xf32>
    %c0_41 = arith.constant 0 : index
    %c0_42 = arith.constant 0 : index
    %82 = vector.load %arg11[%c0_41, %c0_42] : memref<128x128xf32, #tpu.memory_space<vmem>>, vector<128x128xf32>
    tpu.vector_store %arg11[%c0_41, %c0_42], %81 {strides = array<i32>} : memref<128x128xf32, #tpu.memory_space<vmem>>, vector<128x128xf32>,
    %cst_43 = arith.constant 1.000000e-24 : f32
    %83 = vector.broadcast %cst_43 : f32 to vector<128x128xf32>
    %84 = arith.maximumf %77, %83 : vector<128x128xf32>
    %85 = math.rsqrt %84 : vector<128x128xf32>
    %86 = arith.mulf %72, %85 : vector<128x128xf32>
    %c0_44 = arith.constant 0 : index
    %c0_45 = arith.constant 0 : index
    %87 = vector.load %arg12[%c0_44, %c0_45] : memref<128x128xf32, #tpu.memory_space<vmem>>, vector<128x128xf32>
    tpu.vector_store %arg12[%c0_44, %c0_45], %86 {strides = array<i32>} : memref<128x128xf32, #tpu.memory_space<vmem>>, vector<128x128xf32>,
    %c3_i32 = arith.constant 3 : i32
    %88 = arith.cmpi eq, %arg0, %c3_i32 : i32
    %89 = arith.extui %88 : i1 to i32
    %c0_i32_46 = arith.constant 0 : i32
    %90 = arith.cmpi ne, %89, %c0_i32_46 : i32
    scf.if %90 {
      %c0_47 = arith.constant 0 : index
      %c0_48 = arith.constant 0 : index
      %91 = vector.load %arg11[%c0_47, %c0_48] : memref<128x128xf32, #tpu.memory_space<vmem>>, vector<128x128xf32>
      %c0_49 = arith.constant 0 : index
      %c0_50 = arith.constant 0 : index
      %92 = vector.load %arg9[%c0_49, %c0_50] : memref<128x128xf32, #tpu.memory_space<vmem>>, vector<128x128xf32>
      tpu.vector_store %arg9[%c0_49, %c0_50], %91 {strides = array<i32>} : memref<128x128xf32, #tpu.memory_space<vmem>>, vector<128x128xf32>,
      %c0_51 = arith.constant 0 : index
      %c0_52 = arith.constant 0 : index
      %93 = vector.load %arg12[%c0_51, %c0_52] : memref<128x128xf32, #tpu.memory_space<vmem>>, vector<128x128xf32>
      %c0_53 = arith.constant 0 : index
      %c0_54 = arith.constant 0 : index
      %94 = vector.load %arg10[%c0_53, %c0_54] : memref<128x128xf32, #tpu.memory_space<vmem>>, vector<128x128xf32>
      tpu.vector_store %arg10[%c0_53, %c0_54], %93 {strides = array<i32>} : memref<128x128xf32, #tpu.memory_space<vmem>>, vector<128x128xf32>,
    } else {
    }
    return
  }
  func.func @transform_0(%arg0: i32) -> (i32, i32) {
    %c0_i32 = arith.constant 0 : i32
    %c0_i32_0 = arith.constant 0 : i32
    %c0_i32_1 = arith.constant 0 : i32
    return %c0_i32, %c0_i32_0 : i32, i32
  }
  func.func @transform_1(%arg0: i32) -> (i32, i32) {
    %c0_i32 = arith.constant 0 : i32
    %c0_i32_0 = arith.constant 0 : i32
    %c0_i32_1 = arith.constant 0 : i32
    return %c0_i32, %c0_i32_0 : i32, i32
  }
  func.func @transform_2(%arg0: i32) -> (i32, i32) {
    %c0_i32 = arith.constant 0 : i32
    %c0_i32_0 = arith.constant 0 : i32
    %c0_i32_1 = arith.constant 0 : i32
    return %c0_i32, %c0_i32_0 : i32, i32
  }
  func.func @transform_3(%arg0: i32) -> (i32, i32, i32) {
    %c0_i32 = arith.constant 0 : i32
    %c0_i32_0 = arith.constant 0 : i32
    %c0_i32_1 = arith.constant 0 : i32
    return %arg0, %c0_i32, %c0_i32_0 : i32, i32, i32
  }
  func.func @transform_4(%arg0: i32) -> (i32, i32) {
    %c0_i32 = arith.constant 0 : i32
    %c0_i32_0 = arith.constant 0 : i32
    %c0_i32_1 = arith.constant 0 : i32
    return %c0_i32, %c0_i32_0 : i32, i32
  }
  func.func @transform_5(%arg0: i32) -> (i32, i32) {
    %c0_i32 = arith.constant 0 : i32
    %c0_i32_0 = arith.constant 0 : i32
    %c0_i32_1 = arith.constant 0 : i32
    return %c0_i32, %c0_i32_0 : i32, i32
  }
  func.func @transform_6(%arg0: i32) -> (i32, i32) {
    %c0_i32 = arith.constant 0 : i32
    %c0_i32_0 = arith.constant 0 : i32
    %c0_i32_1 = arith.constant 0 : i32
    return %c0_i32, %c0_i32_0 : i32, i32
  }
  func.func @transform_7(%arg0: i32) -> (i32, i32, i32) {
    %c0_i32 = arith.constant 0 : i32
    %c0_i32_0 = arith.constant 0 : i32
    %c0_i32_1 = arith.constant 0 : i32
    return %arg0, %c0_i32, %c0_i32_0 : i32, i32, i32
  }
  func.func @transform_8(%arg0: i32) -> (i32, i32) {
    %c0_i32 = arith.constant 0 : i32
    %c0_i32_0 = arith.constant 0 : i32
    %c0_i32_1 = arith.constant 0 : i32
    return %c0_i32, %c0_i32_0 : i32, i32
  }
  func.func @transform_9(%arg0: i32) -> (i32, i32) {
    %c0_i32 = arith.constant 0 : i32
    %c0_i32_0 = arith.constant 0 : i32
    %c0_i32_1 = arith.constant 0 : i32
    return %c0_i32, %c0_i32_0 : i32, i32
  }
}

</mosaic_0001>

<llo_original>
// kernel: hebbian_rollout.1
$region0: #{hebbian_rollout.1}
  #allocation0 [shape = 'u32[]', space=smem, size = 0x4, offset = 0x4, fixed_abs, tag = 'smem constant byte address 0x4 - core index']
  #allocation1 [shape = 'u32[144,128]{1,0:T(1,128)}', space=vmem, size = 0x12000, scoped, tag = 'internal scratch']
  #allocation2 [shape = 'f32[128,128]{1,0:T(8,128)}', space=vmem, size = 0x10000, scoped, tag = 'scratch operand']
  #allocation3 [shape = 'f32[128,128]{1,0:T(8,128)}', space=vmem, size = 0x10000, scoped, tag = 'scratch operand']
  #allocation4 [shape = 'f32[8,128]{1,0:T(8,128)}', space=vmem, size = 0x1000, scoped, tag = 'scratch operand']
  %s0 = inlined_call_operand.vmem [shape: f32[8,128], index: 0, kind: input, shape index: {}]
  %s1 = inlined_call_operand.vmem [shape: f32[128,128], index: 1, kind: input, shape index: {}]
  %s2 = inlined_call_operand.vmem [shape: f32[128,128], index: 2, kind: input, shape index: {}]
  %s3 = inlined_call_operand.vmem [shape: f32[4,8,128], index: 3, kind: input, shape index: {}]
  %s4 = inlined_call_operand.vmem [shape: f32[128,128], index: 4, kind: input, shape index: {}]
  %s5 = inlined_call_operand.vmem [shape: f32[128,128], index: 5, kind: input, shape index: {}]
  %s6 = inlined_call_operand.vmem [shape: f32[8,128], index: 6, kind: input, shape index: {}]
  %s7 = inlined_call_operand.hbm [shape: f32[4,8,128], index: 7, kind: output, shape index: {0}]
  %s8 = inlined_call_operand.hbm [shape: f32[128,128], index: 8, kind: output, shape index: {1}]
  %s9 = inlined_call_operand.hbm [shape: f32[128,128], index: 9, kind: output, shape index: {2}]
  %10 = xla_tuple %s7, %s8, %s9
  %s11 = sld [smem:[#allocation0]]
  $region85: #{hebbian_rollout.1} parent=0
    _
  %s13 = ssub.s32 1, %s11
  %s14 = scalar_select 0, %s13, %s11
  $region1: #{hebbian_rollout.1} parent=0
    #allocation5 [shape = 'u8[8192]{0}', space=vmem, size = 0x2000, scoped, tag = 'output window, operand 0']
    #allocation6 [shape = 's32[2]{0}', space=sflag, size = 0x8, scoped, tag = 'scoped memory for hebbian_rollout.1']
    #allocation7 [shape = 'u8[65536]{0}', space=vmem, size = 0x10000, scoped, tag = 'output window, operand 1, single buffered']
    #allocation8 [shape = 's32[1]{0}', space=sflag, size = 0x4, scoped, tag = 'scoped memory for hebbian_rollout.1']
    #allocation9 [shape = 'u8[65536]{0}', space=vmem, size = 0x10000, scoped, tag = 'output window, operand 2, single buffered']
    %15 = vsyncpa [#allocation6], 0
    %s16 = scalar_lea.sflag [#allocation6], 1
    %17 = vsyncpa %s16, 0
    %18 = vsyncpa [#allocation8], 0
    loop: start=0, step=1, limit=6
    $region2: #{hebbian_rollout.1} parent=1 // loop_pre_header
      _
    $region3: #{hebbian_rollout.1} parent=1 // loop_header
      %s20 = sphi 0, %s24
      %p21 = scmp.ge.s32.totalorder %s20, 6
      %s28 = sphi 0, %s28
      %s30 = sphi 0, %s28
      %s31 = sphi 0, %s30
      %s45 = sphi 0, %s31
      %s49 = sphi 0, %s49
      %s51 = sphi 0, %s49
      %s52 = sphi 0, %s51
      %s66 = sphi 0, %s52
      %s70 = sphi 0, %s70
      %s72 = sphi 0, %s70
      %s73 = sphi 0, %s72
      %s87 = sphi 0, %s73
      %s93 = sphi 0, %s95
      %s96 = sphi 0, %s93
      %s97 = sphi 0, %s96
      %s113 = sphi 0, %s97
      %s117 = sphi 0, %s117
      %s119 = sphi 0, %s117
      %s120 = sphi 0, %s119
      %s134 = sphi 0, %s120
      %s138 = sphi 0, %s138
      %s140 = sphi 0, %s138
      %s141 = sphi 0, %s140
      %s155 = sphi 0, %s141
      %s159 = sphi 0, %s159
      %s161 = sphi 0, %s159
      %s162 = sphi 0, %s161
      %s176 = sphi 0, %s162
      %s182 = sphi 0, %s184
      %s185 = sphi 0, %s182
      %s186 = sphi 0, %s185
      %s202 = sphi 0, %s186
      %s206 = sphi 0, %s206
      %s208 = sphi 0, %s206
      %s209 = sphi 0, %s208
      %s223 = sphi 0, %s209
      %s227 = sphi 0, %s227
      %s229 = sphi 0, %s227
      %s230 = sphi 0, %s229
      %s244 = sphi 0, %s230
    $region4: #{hebbian_rollout.1} parent=1 // loop_header_branch
      %23 = sbr.rel (%p21) target = $region8
    $region5: #{hebbian_rollout.1} parent=1 // loop_body
      %s25 = ssub.s32 %s20, 1
      %s26 = ssub.s32 %s20, 2
      %s27 = sadd.s32 %s20, 1
      %s29 = sadd.s32 %s28, 1
      %p32 = scmp.eq.s32.totalorder %s20, 3
      %p33 = scmp.ne.s32.totalorder %s28, %s30
      %p34 = scmp.eq.s32.totalorder %s20, 0
      %p35 = por %p33, %p34
      %p36 = scmp.ne.s32.totalorder %s28, %s30
      %p37 = scmp.eq.s32.totalorder %s25, 3
      %p38 = por %p36, %p37
      %p39 = scmp.ne.s32.totalorder %s30, %s31
      %p40 = scmp.eq.s32.totalorder %s25, 0
      %p41 = por %p39, %p40
      %p42 = scmp.ne.s32.totalorder %s30, %s31
      %p43 = scmp.eq.s32.totalorder %s26, 3
      %p44 = por %p42, %p43
      %p46 = scmp.ne.s32.totalorder %s31, %s45
      %p47 = scmp.eq.s32.totalorder %s26, 0
      %p48 = por %p46, %p47
      %s50 = sadd.s32 %s49, 1
      %p53 = scmp.eq.s32.totalorder %s20, 3
      %p54 = scmp.ne.s32.totalorder %s49, %s51
      %p55 = scmp.eq.s32.totalorder %s20, 0
      %p56 = por %p54, %p55
      %p57 = scmp.ne.s32.totalorder %s49, %s51
      %p58 = scmp.eq.s32.totalorder %s25, 3
      %p59 = por %p57, %p58
      %p60 = scmp.ne.s32.totalorder %s51, %s52
      %p61 = scmp.eq.s32.totalorder %s25, 0
      %p62 = por %p60, %p61
      %p63 = scmp.ne.s32.totalorder %s51, %s52
      %p64 = scmp.eq.s32.totalorder %s26, 3
      %p65 = por %p63, %p64
      %p67 = scmp.ne.s32.totalorder %s52, %s66
      %p68 = scmp.eq.s32.totalorder %s26, 0
      %p69 = por %p67, %p68
      %s71 = sadd.s32 %s70, 1
      %p74 = scmp.eq.s32.totalorder %s20, 3
      %p75 = scmp.ne.s32.totalorder %s70, %s72
      %p76 = scmp.eq.s32.totalorder %s20, 0
      %p77 = por %p75, %p76
      %p78 = scmp.ne.s32.totalorder %s70, %s72
      %p79 = scmp.eq.s32.totalorder %s25, 3
      %p80 = por %p78, %p79
      %p81 = scmp.ne.s32.totalorder %s72, %s73
      %p82 = scmp.eq.s32.totalorder %s25, 0
      %p83 = por %p81, %p82
      %p84 = scmp.ne.s32.totalorder %s72, %s73
      %p85 = scmp.eq.s32.totalorder %s26, 3
      %p86 = por %p84, %p85
      %p88 = scmp.ne.s32.totalorder %s73, %s87
      %p89 = scmp.eq.s32.totalorder %s26, 0
      %p90 = por %p88, %p89
      %s91 = ssub.s32 %s20, %s27
      %p92 = scmp.eq.s32.totalorder %s91, 0
      %s94 = sadd.s32 %s93, 1
      %s95 = scalar_select %p92, %s93, %s94
      %p98 = pneg %p92
      %p99 = scmp.eq.s32.totalorder %s20, 3
      %p100 = por %p98, %p99
      %p101 = scmp.ne.s32.totalorder %s93, %s96
      %p102 = scmp.eq.s32.totalorder %s20, 0
      %p103 = por %p101, %p102
      %p104 = scmp.ne.s32.totalorder %s93, %s96
      %p105 = scmp.eq.s32.totalorder %s25, 3
      %p106 = por %p104, %p105
      %p107 = scmp.ne.s32.totalorder %s96, %s97
      %p108 = scmp.eq.s32.totalorder %s25, 0
      %p109 = por %p107, %p108
      %p110 = scmp.ne.s32.totalorder %s96, %s97
      %p111 = scmp.eq.s32.totalorder %s26, 3
      %p112 = por %p110, %p111
      %p114 = scmp.ne.s32.totalorder %s97, %s113
      %p115 = scmp.eq.s32.totalorder %s26, 0
      %p116 = por %p114, %p115
      %s118 = sadd.s32 %s117, 1
      %p121 = scmp.eq.s32.totalorder %s20, 3
      %p122 = scmp.ne.s32.totalorder %s117, %s119
      %p123 = scmp.eq.s32.totalorder %s20, 0
      %p124 = por %p122, %p123
      %p125 = scmp.ne.s32.totalorder %s117, %s119
      %p126 = scmp.eq.s32.totalorder %s25, 3
      %p127 = por %p125, %p126
      %p128 = scmp.ne.s32.totalorder %s119, %s120
      %p129 = scmp.eq.s32.totalorder %s25, 0
      %p130 = por %p128, %p129
      %p131 = scmp.ne.s32.totalorder %s119, %s120
      %p132 = scmp.eq.s32.totalorder %s26, 3
      %p133 = por %p131, %p132
      %p135 = scmp.ne.s32.totalorder %s120, %s134
      %p136 = scmp.eq.s32.totalorder %s26, 0
      %p137 = por %p135, %p136
      %s139 = sadd.s32 %s138, 1
      %p142 = scmp.eq.s32.totalorder %s20, 3
      %p143 = scmp.ne.s32.totalorder %s138, %s140
      %p144 = scmp.eq.s32.totalorder %s20, 0
      %p145 = por %p143, %p144
      %p146 = scmp.ne.s32.totalorder %s138, %s140
      %p147 = scmp.eq.s32.totalorder %s25, 3
      %p148 = por %p146, %p147
      %p149 = scmp.ne.s32.totalorder %s140, %s141
      %p150 = scmp.eq.s32.totalorder %s25, 0
      %p151 = por %p149, %p150
      %p152 = scmp.ne.s32.totalorder %s140, %s141
      %p153 = scmp.eq.s32.totalorder %s26, 3
      %p154 = por %p152, %p153
      %p156 = scmp.ne.s32.totalorder %s141, %s155
      %p157 = scmp.eq.s32.totalorder %s26, 0
      %p158 = por %p156, %p157
      %s160 = sadd.s32 %s159, 1
      %p163 = scmp.eq.s32.totalorder %s20, 3
      %p164 = scmp.ne.s32.totalorder %s159, %s161
      %p165 = scmp.eq.s32.totalorder %s20, 0
      %p166 = por %p164, %p165
      %p167 = scmp.ne.s32.totalorder %s159, %s161
      %p168 = scmp.eq.s32.totalorder %s25, 3
      %p169 = por %p167, %p168
      %p170 = scmp.ne.s32.totalorder %s161, %s162
      %p171 = scmp.eq.s32.totalorder %s25, 0
      %p172 = por %p170, %p171
      %p173 = scmp.ne.s32.totalorder %s161, %s162
      %p174 = scmp.eq.s32.totalorder %s26, 3
      %p175 = por %p173, %p174
      %p177 = scmp.ne.s32.totalorder %s162, %s176
      %p178 = scmp.eq.s32.totalorder %s26, 0
      %p179 = por %p177, %p178
      %s180 = ssub.s32 %s20, %s27
      %p181 = scmp.eq.s32.totalorder %s180, 0
      %s183 = sadd.s32 %s182, 1
      %s184 = scalar_select %p181, %s182, %s183
      %p187 = pneg %p181
      %p188 = scmp.eq.s32.totalorder %s20, 3
      %p189 = por %p187, %p188
      %p190 = scmp.ne.s32.totalorder %s182, %s185
      %p191 = scmp.eq.s32.totalorder %s20, 0
      %p192 = por %p190, %p191
      %p193 = scmp.ne.s32.totalorder %s182, %s185
      %p194 = scmp.eq.s32.totalorder %s25, 3
      %p195 = por %p193, %p194
      %p196 = scmp.ne.s32.totalorder %s185, %s186
      %p197 = scmp.eq.s32.totalorder %s25, 0
      %p198 = por %p196, %p197
      %p199 = scmp.ne.s32.totalorder %s185, %s186
      %p200 = scmp.eq.s32.totalorder %s26, 3
      %p201 = por %p199, %p200
      %p203 = scmp.ne.s32.totalorder %s186, %s202
      %p204 = scmp.eq.s32.totalorder %s26, 0
      %p205 = por %p203, %p204
      %s207 = sadd.s32 %s206, 1
      %p210 = scmp.eq.s32.totalorder %s20, 3
      %p211 = scmp.ne.s32.totalorder %s206, %s208
      %p212 = scmp.eq.s32.totalorder %s20, 0
      %p213 = por %p211, %p212
      %p214 = scmp.ne.s32.totalorder %s206, %s208
      %p215 = scmp.eq.s32.totalorder %s25, 3
      %p216 = por %p214, %p215
      %p217 = scmp.ne.s32.totalorder %s208, %s209
      %p218 = scmp.eq.s32.totalorder %s25, 0
      %p219 = por %p217, %p218
      %p220 = scmp.ne.s32.totalorder %s208, %s209
      %p221 = scmp.eq.s32.totalorder %s26, 3
      %p222 = por %p220, %p221
      %p224 = scmp.ne.s32.totalorder %s209, %s223
      %p225 = scmp.eq.s32.totalorder %s26, 0
      %p226 = por %p224, %p225
      %s228 = sadd.s32 %s227, 1
      %p231 = scmp.eq.s32.totalorder %s20, 3
      %p232 = scmp.ne.s32.totalorder %s227, %s229
      %p233 = scmp.eq.s32.totalorder %s20, 0
      %p234 = por %p232, %p233
      %p235 = scmp.ne.s32.totalorder %s227, %s229
      %p236 = scmp.eq.s32.totalorder %s25, 3
      %p237 = por %p235, %p236
      %p238 = scmp.ne.s32.totalorder %s229, %s230
      %p239 = scmp.eq.s32.totalorder %s25, 0
      %p240 = por %p238, %p239
      %p241 = scmp.ne.s32.totalorder %s229, %s230
      %p242 = scmp.eq.s32.totalorder %s26, 3
      %p243 = por %p241, %p242
      %p245 = scmp.ne.s32.totalorder %s230, %s244
      %p246 = scmp.eq.s32.totalorder %s26, 0
      %p247 = por %p245, %p246
      %p248 = scmp.le.s32.totalorder 1, %s20
      %p249 = scmp.lt.s32.totalorder %s20, 5
      %p250 = pnand %p248, %p249
      %p251 = pneg %p250
      // Predicated region
      $region9: #{hebbian_rollout.1} parent=5 // pred_check
        _
      $region10: #{hebbian_rollout.1} parent=5 // pred_check_branch
        %253 = sbr.rel (%p250) target = $region12
      $region11: #{hebbian_rollout.1} parent=5 // pred_region
        %s254 = ssub.s32 %s20, 1
        // Predicated region
        $region13: #{hebbian_rollout.1} parent=11 // pred_check
          %p255 = pneg %p41
        $region14: #{hebbian_rollout.1} parent=11 // pred_check_branch
          %257 = sbr.rel (%p255) target = $region16
        $region15: #{hebbian_rollout.1} parent=11 // pred_region
          _
        $region16: #{hebbian_rollout.1} parent=11 // pred_fallthru
          _
        // Predicated region
        $region17: #{hebbian_rollout.1} parent=11 // pred_check
          %p258 = pneg %p62
        $region18: #{hebbian_rollout.1} parent=11 // pred_check_branch
          %260 = sbr.rel (%p258) target = $region20
        $region19: #{hebbian_rollout.1} parent=11 // pred_region
          _
        $region20: #{hebbian_rollout.1} parent=11 // pred_fallthru
          _
        // Predicated region
        $region21: #{hebbian_rollout.1} parent=11 // pred_check
          %p261 = pneg %p83
        $region22: #{hebbian_rollout.1} parent=11 // pred_check_branch
          %263 = sbr.rel (%p261) target = $region24
        $region23: #{hebbian_rollout.1} parent=11 // pred_region
          _
        $region24: #{hebbian_rollout.1} parent=11 // pred_fallthru
          _
        // Predicated region
        $region25: #{hebbian_rollout.1} parent=11 // pred_check
          %p264 = pneg %p130
        $region26: #{hebbian_rollout.1} parent=11 // pred_check_branch
          %266 = sbr.rel (%p264) target = $region28
        $region27: #{hebbian_rollout.1} parent=11 // pred_region
          _
        $region28: #{hebbian_rollout.1} parent=11 // pred_fallthru
          _
        // Predicated region
        $region29: #{hebbian_rollout.1} parent=11 // pred_check
          %p267 = pneg %p151
        $region30: #{hebbian_rollout.1} parent=11 // pred_check_branch
          %269 = sbr.rel (%p267) target = $region32
        $region31: #{hebbian_rollout.1} parent=11 // pred_region
          _
        $region32: #{hebbian_rollout.1} parent=11 // pred_fallthru
          _
        // Predicated region
        $region33: #{hebbian_rollout.1} parent=11 // pred_check
          %p270 = pneg %p172
        $region34: #{hebbian_rollout.1} parent=11 // pred_check_branch
          %272 = sbr.rel (%p270) target = $region36
        $region35: #{hebbian_rollout.1} parent=11 // pred_region
          _
        $region36: #{hebbian_rollout.1} parent=11 // pred_fallthru
          _
      $region12: #{hebbian_rollout.1} parent=5 // pred_fallthru
        _
      %p273 = scmp.lt.s32.totalorder %s20, 4
      // Predicated region
      $region37: #{hebbian_rollout.1} parent=5 // pred_check
        %p274 = pneg %p273
      $region38: #{hebbian_rollout.1} parent=5 // pred_check_branch
        %276 = sbr.rel (%p274) target = $region40
      $region39: #{hebbian_rollout.1} parent=5 // pred_region
        // Predicated region
        $region41: #{hebbian_rollout.1} parent=39 // pred_check
          %p277 = pneg %p103
        $region42: #{hebbian_rollout.1} parent=39 // pred_check_branch
          %279 = sbr.rel (%p277) target = $region44
        $region43: #{hebbian_rollout.1} parent=39 // pred_region
          %p280 = scmp.lt.s32.totalorder %s20, 3
          %s281 = scalar_select %p280, %s20, 3
          %s282 = smul.addr %s281, 8
          %s283 = scalar_lea.vmem %s3, %s282
        $region44: #{hebbian_rollout.1} parent=39 // pred_fallthru
          _
      $region40: #{hebbian_rollout.1} parent=5 // pred_fallthru
        _
      %p284 = scmp.le.s32.totalorder 1, %s20
      %p285 = scmp.lt.s32.totalorder %s20, 5
      %p286 = pnand %p284, %p285
      %p287 = pneg %p286
      // Predicated region
      $region45: #{hebbian_rollout.1} parent=5 // pred_check
        _
      $region46: #{hebbian_rollout.1} parent=5 // pred_check_branch
        %289 = sbr.rel (%p286) target = $region48
      $region47: #{hebbian_rollout.1} parent=5 // pred_region
        %s290 = ssub.s32 %s20, 1
        %p291 = pneg %p41
        %p292 = pneg %p38
        %p293 = pneg %p62
        %p294 = pneg %p59
        %p295 = pneg %p83
        %p296 = pneg %p80
        %p297 = scmp.lt.s32.totalorder %s25, 3
        %s298 = scalar_select %p297, %s25, 3
        %s299 = smul.addr %s298, 8
        %s300 = scalar_lea.vmem %s3, %s299
        %p301 = pneg %p109
        %p302 = pneg %p106
        %p303 = pneg %p130
        %p304 = pneg %p127
        %p305 = pneg %p151
        %p306 = pneg %p148
        %p307 = pneg %p172
        %p308 = pneg %p169
        %p309 = pneg %p198
        %p310 = pneg %p195
        %s311 = sand.u32 %s185, 1
        %s312 = scalar_lea.sflag [#allocation6], %s311
        %s313 = sand.u32 %s185, 1
        %s314 = smul.addr %s313, 8
        %s315 = scalar_lea.vmem [#allocation5], %s314
        %p316 = pneg %p219
        %p317 = pneg %p216
        %p318 = pneg %p240
        %p319 = pneg %p237
        %p320 = scmp.lt.s32.totalorder %s25, 3
        %s321 = scalar_select %p320, %s25, 3
        %s322 = smul.addr %s321, 8
        %s323 = scalar_lea.vmem %s3, %s322
        %p324 = scmp.eq.s32.totalorder %s25, 0
        // Predicated region
        $region49: #{hebbian_rollout.1} parent=47 // pred_check
          %p325 = pneg %p324
        $region50: #{hebbian_rollout.1} parent=47 // pred_check_branch
          %327 = sbr.rel (%p325) target = $region52
        $region51: #{hebbian_rollout.1} parent=47 // pred_region
          %v328 = vld [vmem:[%s4] sm:$0xff]
          %v329 = vld [vmem:[%s4 + $0x8] sm:$0xff]
          %v330 = vld [vmem:[%s4 + $0x10] sm:$0xff]
          %v331 = vld [vmem:[%s4 + $0x18] sm:$0xff]
          %v332 = vld [vmem:[%s4 + $0x20] sm:$0xff]
          %v333 = vld [vmem:[%s4 + $0x28] sm:$0xff]
          %v334 = vld [vmem:[%s4 + $0x30] sm:$0xff]
          %v335 = vld [vmem:[%s4 + $0x38] sm:$0xff]
          %v336 = vld [vmem:[%s4 + $0x40] sm:$0xff]
          %v337 = vld [vmem:[%s4 + $0x48] sm:$0xff]
          %v338 = vld [vmem:[%s4 + $0x50] sm:$0xff]
          %v339 = vld [vmem:[%s4 + $0x58] sm:$0xff]
          %v340 = vld [vmem:[%s4 + $0x60] sm:$0xff]
          %v341 = vld [vmem:[%s4 + $0x68] sm:$0xff]
          %v342 = vld [vmem:[%s4 + $0x70] sm:$0xff]
          %v343 = vld [vmem:[%s4 + $0x78] sm:$0xff]
          %344 = vst [vmem:[#allocation2] sm:$0xff] %v328
          %345 = vst [vmem:[#allocation2 + $0x8] sm:$0xff] %v329
          %346 = vst [vmem:[#allocation2 + $0x10] sm:$0xff] %v330
          %347 = vst [vmem:[#allocation2 + $0x18] sm:$0xff] %v331
          %348 = vst [vmem:[#allocation2 + $0x20] sm:$0xff] %v332
          %349 = vst [vmem:[#allocation2 + $0x28] sm:$0xff] %v333
          %350 = vst [vmem:[#allocation2 + $0x30] sm:$0xff] %v334
          %351 = vst [vmem:[#allocation2 + $0x38] sm:$0xff] %v335
          %352 = vst [vmem:[#allocation2 + $0x40] sm:$0xff] %v336
          %353 = vst [vmem:[#allocation2 + $0x48] sm:$0xff] %v337
          %354 = vst [vmem:[#allocation2 + $0x50] sm:$0xff] %v338
          %355 = vst [vmem:[#allocation2 + $0x58] sm:$0xff] %v339
          %356 = vst [vmem:[#allocation2 + $0x60] sm:$0xff] %v340
          %357 = vst [vmem:[#allocation2 + $0x68] sm:$0xff] %v341
          %358 = vst [vmem:[#allocation2 + $0x70] sm:$0xff] %v342
          %359 = vst [vmem:[#allocation2 + $0x78] sm:$0xff] %v343
          %v360 = vld [vmem:[%s5] sm:$0xff]
          %v361 = vld [vmem:[%s5 + $0x8] sm:$0xff]
          %v362 = vld [vmem:[%s5 + $0x10] sm:$0xff]
          %v363 = vld [vmem:[%s5 + $0x18] sm:$0xff]
          %v364 = vld [vmem:[%s5 + $0x20] sm:$0xff]
          %v365 = vld [vmem:[%s5 + $0x28] sm:$0xff]
          %v366 = vld [vmem:[%s5 + $0x30] sm:$0xff]
          %v367 = vld [vmem:[%s5 + $0x38] sm:$0xff]
          %v368 = vld [vmem:[%s5 + $0x40] sm:$0xff]
          %v369 = vld [vmem:[%s5 + $0x48] sm:$0xff]
          %v370 = vld [vmem:[%s5 + $0x50] sm:$0xff]
          %v371 = vld [vmem:[%s5 + $0x58] sm:$0xff]
          %v372 = vld [vmem:[%s5 + $0x60] sm:$0xff]
          %v373 = vld [vmem:[%s5 + $0x68] sm:$0xff]
          %v374 = vld [vmem:[%s5 + $0x70] sm:$0xff]
          %v375 = vld [vmem:[%s5 + $0x78] sm:$0xff]
          %376 = vst [vmem:[#allocation3] sm:$0xff] %v360
          %377 = vst [vmem:[#allocation3 + $0x8] sm:$0xff] %v361
          %378 = vst [vmem:[#allocation3 + $0x10] sm:$0xff] %v362
          %379 = vst [vmem:[#allocation3 + $0x18] sm:$0xff] %v363
          %380 = vst [vmem:[#allocation3 + $0x20] sm:$0xff] %v364
          %381 = vst [vmem:[#allocation3 + $0x28] sm:$0xff] %v365
          %382 = vst [vmem:[#allocation3 + $0x30] sm:$0xff] %v366
          %383 = vst [vmem:[#allocation3 + $0x38] sm:$0xff] %v367
          %384 = vst [vmem:[#allocation3 + $0x40] sm:$0xff] %v368
          %385 = vst [vmem:[#allocation3 + $0x48] sm:$0xff] %v369
          %386 = vst [vmem:[#allocation3 + $0x50] sm:$0xff] %v370
          %387 = vst [vmem:[#allocation3 + $0x58] sm:$0xff] %v371
          %388 = vst [vmem:[#allocation3 + $0x60] sm:$0xff] %v372
          %389 = vst [vmem:[#allocation3 + $0x68] sm:$0xff] %v373
          %390 = vst [vmem:[#allocation3 + $0x70] sm:$0xff] %v374
          %391 = vst [vmem:[#allocation3 + $0x78] sm:$0xff] %v375
          %v392 = vld [vmem:[%s6] sm:$0xff]
          %393 = vst [vmem:[#allocation4] sm:$0xff] %v392
        $region52: #{hebbian_rollout.1} parent=47 // pred_fallthru
          _
        %v394 = vld [vmem:[%s0] sm:$0x1]
        %v395 = vld [vmem:[%s0 + $0x1] sm:$0x1]
        %v396 = vld [vmem:[%s0 + $0x2] sm:$0x1]
        %v397 = vld [vmem:[%s0 + $0x3] sm:$0x1]
        %v398 = vld [vmem:[%s0 + $0x4] sm:$0x1]
        %v399 = vld [vmem:[%s323] sm:$0xff]
        %v400 = vld [vmem:[#allocation4] sm:$0xff]
        %v401 = vld [vmem:[#allocation2] sm:$0xff]
        %v402 = vld [vmem:[#allocation2 + $0x8] sm:$0xff]
        %v403 = vld [vmem:[#allocation2 + $0x10] sm:$0xff]
        %v404 = vld [vmem:[#allocation2 + $0x18] sm:$0xff]
        %v405 = vld [vmem:[#allocation2 + $0x20] sm:$0xff]
        %v406 = vld [vmem:[#allocation2 + $0x28] sm:$0xff]
        %v407 = vld [vmem:[#allocation2 + $0x30] sm:$0xff]
        %v408 = vld [vmem:[#allocation2 + $0x38] sm:$0xff]
        %v409 = vld [vmem:[#allocation2 + $0x40] sm:$0xff]
        %v410 = vld [vmem:[#allocation2 + $0x48] sm:$0xff]
        %v411 = vld [vmem:[#allocation2 + $0x50] sm:$0xff]
        %v412 = vld [vmem:[#allocation2 + $0x58] sm:$0xff]
        %v413 = vld [vmem:[#allocation2 + $0x60] sm:$0xff]
        %v414 = vld [vmem:[#allocation2 + $0x68] sm:$0xff]
        %v415 = vld [vmem:[#allocation2 + $0x70] sm:$0xff]
        %v416 = vld [vmem:[#allocation2 + $0x78] sm:$0xff]
        %v417 = vld [vmem:[#allocation3] sm:$0xff]
        %v418 = vld [vmem:[#allocation3 + $0x8] sm:$0xff]
        %v419 = vld [vmem:[#allocation3 + $0x10] sm:$0xff]
        %v420 = vld [vmem:[#allocation3 + $0x18] sm:$0xff]
        %v421 = vld [vmem:[#allocation3 + $0x20] sm:$0xff]
        %v422 = vld [vmem:[#allocation3 + $0x28] sm:$0xff]
        %v423 = vld [vmem:[#allocation3 + $0x30] sm:$0xff]
        %v424 = vld [vmem:[#allocation3 + $0x38] sm:$0xff]
        %v425 = vld [vmem:[#allocation3 + $0x40] sm:$0xff]
        %v426 = vld [vmem:[#allocation3 + $0x48] sm:$0xff]
        %v427 = vld [vmem:[#allocation3 + $0x50] sm:$0xff]
        %v428 = vld [vmem:[#allocation3 + $0x58] sm:$0xff]
        %v429 = vld [vmem:[#allocation3 + $0x60] sm:$0xff]
        %v430 = vld [vmem:[#allocation3 + $0x68] sm:$0xff]
        %v431 = vld [vmem:[#allocation3 + $0x70] sm:$0xff]
        %v432 = vld [vmem:[#allocation3 + $0x78] sm:$0xff]
        %433 = vmatprep.subr.mxu0 0.0
        %434 = vmatpush1.msra.mxu0 %v417
        %435 = vmatprep.subr.mxu0 0.0
        %436 = vmatpush1.msra.mxu0 %v418
        %437 = vmatprep.subr.mxu0 0.0
        %438 = vmatpush1.msra.mxu0 %v419
        %439 = vmatprep.subr.mxu0 0.0
        %440 = vmatpush1.msra.mxu0 %v420
        %441 = vmatprep.subr.mxu0 0.0
        %442 = vmatpush1.msra.mxu0 %v421
        %443 = vmatprep.subr.mxu0 0.0
        %444 = vmatpush1.msra.mxu0 %v422
        %445 = vmatprep.subr.mxu0 0.0
        %446 = vmatpush1.msra.mxu0 %v423
        %447 = vmatprep.subr.mxu0 0.0
        %448 = vmatpush1.msra.mxu0 %v424
        %449 = vmatprep.subr.mxu0 0.0
        %450 = vmatpush1.msra.mxu0 %v425
        %451 = vmatprep.subr.mxu0 0.0
        %452 = vmatpush1.msra.mxu0 %v426
        %453 = vmatprep.subr.mxu0 0.0
        %454 = vmatpush1.msra.mxu0 %v427
        %455 = vmatprep.subr.mxu0 0.0
        %456 = vmatpush1.msra.mxu0 %v428
        %457 = vmatprep.subr.mxu0 0.0
        %458 = vmatpush1.msra.mxu0 %v429
        %459 = vmatprep.subr.mxu0 0.0
        %460 = vmatpush1.msra.mxu0 %v430
        %461 = vmatprep.subr.mxu0 0.0
        %462 = vmatpush1.msra.mxu0 %v431
        %463 = vmatprep.subr.mxu0 0.0
        %464 = vmatpush1.msra.mxu0 %v432
        %465 = vmatprep.subr.mxu0 0.0
        %466 = vmatpush1.msra.mxu0 0.0
        %467 = vmatprep.subr.mxu0 0.0
        %468 = vmatpush1.msra.mxu0 0.0
        %469 = vmatprep.subr.mxu0 0.0
        %470 = vmatpush1.msra.mxu0 0.0
        %471 = vmatprep.subr.mxu0 0.0
        %472 = vmatpush1.msra.mxu0 0.0
        %473 = vmatprep.subr.mxu0 0.0
        %474 = vmatpush1.msra.mxu0 0.0
        %475 = vmatprep.subr.mxu0 0.0
        %476 = vmatpush1.msra.mxu0 0.0
        %477 = vmatprep.subr.mxu0 0.0
        %478 = vmatpush1.msra.mxu0 0.0
        %479 = vmatprep.subr.mxu0 0.0
        %480 = vmatpush1.msra.mxu0 0.0
        %481 = vmatprep.subr.mxu0 0.0
        %482 = vmatpush1.msra.mxu0 0.0
        %483 = vmatprep.subr.mxu0 0.0
        %484 = vmatpush1.msra.mxu0 0.0
        %485 = vmatprep.subr.mxu0 0.0
        %486 = vmatpush1.msra.mxu0 0.0
        %487 = vmatprep.subr.mxu0 0.0
        %488 = vmatpush1.msra.mxu0 0.0
        %489 = vmatprep.subr.mxu0 0.0
        %490 = vmatpush1.msra.mxu0 0.0
        %491 = vmatprep.subr.mxu0 0.0
        %492 = vmatpush1.msra.mxu0 0.0
        %493 = vmatprep.subr.mxu0 0.0
        %494 = vmatpush1.msra.mxu0 0.0
        %495 = vmatprep.subr.mxu0 0.0
        %496 = vmatpush1.msra.mxu0 0.0
        %497 = vmatprep.mubr.f32.mxu0 0.0
        %498 = vmatmul.mubr.f32.gmra.mrb[0].mxu0 %v400
        %v499 = vpop.f32.mrb[0].mxu0
        %v500 = vadd.f32 0.0, %v499
        %v501 = vpop.f32.mrb[0].mxu0
        %502 = vdwg.mxu0
        %503 = vadd.xlane.f32.xlu0 %v500
        %v504 = vpop.xlane.xlu0 %503
        %v505 = vrcp.pop 128.0
        %v506 = vmul.f32 %v504, %v505
        %v507 = vsub.f32 %v500, %v506
        %v508 = vmul.f32 %v507, %v507
        %509 = vadd.xlane.f32.xlu0 %v508
        %v510 = vpop.xlane.xlu0 %509
        %v511 = vmul.f32 %v510, %v505
        %v512 = vadd.f32 %v511, 1e-05
        %v513 = vrsqrt.pop %v512
        %v514 = vmul.f32 %v507, %v513
        %v515 = vlaneseq
        %v516 = vshrl.u32 %v515, 7
        %v517 = vsub.s32 0, %v516
        %v518 = vrot.slane %v395, %v517
        %v519 = vmul.f32 %v514, %v518
        %v520 = vlaneseq
        %v521 = vshrl.u32 %v520, 7
        %v522 = vsub.s32 0, %v521
        %v523 = vrot.slane %v396, %v522
        %v524 = vadd.f32 %v519, %v523
        %525 = vmatprep.subr.mxu0 0.0
        %526 = vmatpush1.msra.mxu0 %v401
        %527 = vmatprep.subr.mxu0 0.0
        %528 = vmatpush1.msra.mxu0 %v402
        %529 = vmatprep.subr.mxu0 0.0
        %530 = vmatpush1.msra.mxu0 %v403
        %531 = vmatprep.subr.mxu0 0.0
        %532 = vmatpush1.msra.mxu0 %v404
        %533 = vmatprep.subr.mxu0 0.0
        %534 = vmatpush1.msra.mxu0 %v405
        %535 = vmatprep.subr.mxu0 0.0
        %536 = vmatpush1.msra.mxu0 %v406
        %537 = vmatprep.subr.mxu0 0.0
        %538 = vmatpush1.msra.mxu0 %v407
        %539 = vmatprep.subr.mxu0 0.0
        %540 = vmatpush1.msra.mxu0 %v408
        %541 = vmatprep.subr.mxu0 0.0
        %542 = vmatpush1.msra.mxu0 %v409
        %543 = vmatprep.subr.mxu0 0.0
        %544 = vmatpush1.msra.mxu0 %v410
        %545 = vmatprep.subr.mxu0 0.0
        %546 = vmatpush1.msra.mxu0 %v411
        %547 = vmatprep.subr.mxu0 0.0
        %548 = vmatpush1.msra.mxu0 %v412
        %549 = vmatprep.subr.mxu0 0.0
        %550 = vmatpush1.msra.mxu0 %v413
        %551 = vmatprep.subr.mxu0 0.0
        %552 = vmatpush1.msra.mxu0 %v414
        %553 = vmatprep.subr.mxu0 0.0
        %554 = vmatpush1.msra.mxu0 %v415
        %555 = vmatprep.subr.mxu0 0.0
        %556 = vmatpush1.msra.mxu0 %v416
        %557 = vmatprep.subr.mxu0 0.0
        %558 = vmatpush1.msra.mxu0 0.0
        %559 = vmatprep.subr.mxu0 0.0
        %560 = vmatpush1.msra.mxu0 0.0
        %561 = vmatprep.subr.mxu0 0.0
        %562 = vmatpush1.msra.mxu0 0.0
        %563 = vmatprep.subr.mxu0 0.0
        %564 = vmatpush1.msra.mxu0 0.0
        %565 = vmatprep.subr.mxu0 0.0
        %566 = vmatpush1.msra.mxu0 0.0
        %567 = vmatprep.subr.mxu0 0.0
        %568 = vmatpush1.msra.mxu0 0.0
        %569 = vmatprep.subr.mxu0 0.0
        %570 = vmatpush1.msra.mxu0 0.0
        %571 = vmatprep.subr.mxu0 0.0
        %572 = vmatpush1.msra.mxu0 0.0
        %573 = vmatprep.subr.mxu0 0.0
        %574 = vmatpush1.msra.mxu0 0.0
        %575 = vmatprep.subr.mxu0 0.0
        %576 = vmatpush1.msra.mxu0 0.0
        %577 = vmatprep.subr.mxu0 0.0
        %578 = vmatpush1.msra.mxu0 0.0
        %579 = vmatprep.subr.mxu0 0.0
        %580 = vmatpush1.msra.mxu0 0.0
        %581 = vmatprep.subr.mxu0 0.0
        %582 = vmatpush1.msra.mxu0 0.0
        %583 = vmatprep.subr.mxu0 0.0
        %584 = vmatpush1.msra.mxu0 0.0
        %585 = vmatprep.subr.mxu0 0.0
        %586 = vmatpush1.msra.mxu0 0.0
        %587 = vmatprep.subr.mxu0 0.0
        %588 = vmatpush1.msra.mxu0 0.0
        %589 = vmatprep.mubr.f32.mxu0 0.0
        %590 = vmatmul.mubr.f32.gmra.mrb[0].mxu0 %v399
        %v591 = vpop.f32.mrb[0].mxu0
        %v592 = vadd.f32 0.0, %v591
        %v593 = vpop.f32.mrb[0].mxu0
        %594 = vdwg.mxu0
        %v595 = vadd.f32 %v592, %v524
        %v596 = vmax.f32 %v595, 0.0
        %597 = vadd.xlane.f32.xlu0 %v596
        %v598 = vpop.xlane.xlu0 %597
        %v599 = vmul.f32 %v598, %v505
        %v600 = vsub.f32 %v596, %v599
        %v601 = vmul.f32 %v600, %v600
        %602 = vadd.xlane.f32.xlu0 %v601
        %v603 = vpop.xlane.xlu0 %602
        %v604 = vmul.f32 %v603, %v505
        %v605 = vadd.f32 %v604, 1e-05
        %v606 = vrsqrt.pop %v605
        %v607 = vmul.f32 %v600, %v606
        %v608 = vlaneseq
        %v609 = vshrl.u32 %v608, 7
        %v610 = vsub.s32 0, %v609
        %v611 = vrot.slane %v397, %v610
        %v612 = vmul.f32 %v607, %v611
        %v613 = vlaneseq
        %v614 = vshrl.u32 %v613, 7
        %v615 = vsub.s32 0, %v614
        %v616 = vrot.slane %v398, %v615
        %v617 = vadd.f32 %v612, %v616
        %618 = vst [vmem:[%s315] sm:$0xff] %v617
        %619 = vst [vmem:[#allocation4] sm:$0xff] %v617
        %620 = vxpose.xlu0.b32.start [1/16] %v399, 128
        %621 = vxpose.xlu0.b32.cont [2/16] 0.0, 128
        %622 = vxpose.xlu0.b32.cont [3/16] 0.0, 128
        %623 = vxpose.xlu0.b32.cont [4/16] 0.0, 128
        %624 = vxpose.xlu0.b32.cont [5/16] 0.0, 128
        %625 = vxpose.xlu0.b32.cont [6/16] 0.0, 128
        %626 = vxpose.xlu0.b32.cont [7/16] 0.0, 128
        %627 = vxpose.xlu0.b32.cont [8/16] 0.0, 128
        %628 = vxpose.xlu0.b32.cont [9/16] 0.0, 128
        %629 = vxpose.xlu0.b32.cont [10/16] 0.0, 128
        %630 = vxpose.xlu0.b32.cont [11/16] 0.0, 128
        %631 = vxpose.xlu0.b32.cont [12/16] 0.0, 128
        %632 = vxpose.xlu0.b32.cont [13/16] 0.0, 128
        %633 = vxpose.xlu0.b32.cont [14/16] 0.0, 128
        %634 = vxpose.xlu0.b32.cont [15/16] 0.0, 128
        %635 = vxpose.xlu0.b32.end [16/16] 0.0, 128
        %v636 = vpop.trf.xlu0
        %v637 = vpop.trf.xlu0
        %v638 = vpop.trf.xlu0
        %v639 = vpop.trf.xlu0
        %v640 = vpop.trf.xlu0
        %v641 = vpop.trf.xlu0
        %v642 = vpop.trf.xlu0
        %v643 = vpop.trf.xlu0
        %v644 = vpop.trf.xlu0
        %v645 = vpop.trf.xlu0
        %v646 = vpop.trf.xlu0
        %v647 = vpop.trf.xlu0
        %v648 = vpop.trf.xlu0
        %v649 = vpop.trf.xlu0
        %v650 = vpop.trf.xlu0
        %v651 = vpop.trf.xlu0
        %vm652 = vcmask 64512
        %v654 = vsel %vm652, %v636, 0
        %v657 = vsel %vm652, %v637, 0
        %v660 = vsel %vm652, %v638, 0
        %v663 = vsel %vm652, %v639, 0
        %v666 = vsel %vm652, %v640, 0
        %v669 = vsel %vm652, %v641, 0
        %v672 = vsel %vm652, %v642, 0
        %v675 = vsel %vm652, %v643, 0
        %v678 = vsel %vm652, %v644, 0
        %v681 = vsel %vm652, %v645, 0
        %v684 = vsel %vm652, %v646, 0
        %v687 = vsel %vm652, %v647, 0
        %v690 = vsel %vm652, %v648, 0
        %v693 = vsel %vm652, %v649, 0
        %v696 = vsel %vm652, %v650, 0
        %v699 = vsel %vm652, %v651, 0
        %701 = vmatprep.subr.mxu0 0.0
        %702 = vmatpush1.msra.mxu0 %v592
        %703 = vmatprep.subr.mxu0 0.0
        %704 = vmatpush1.msra.mxu0 0.0
        %705 = vmatprep.subr.mxu0 0.0
        %706 = vmatpush1.msra.mxu0 0.0
        %707 = vmatprep.subr.mxu0 0.0
        %708 = vmatpush1.msra.mxu0 0.0
        %709 = vmatprep.subr.mxu0 0.0
        %710 = vmatpush1.msra.mxu0 0.0
        %711 = vmatprep.subr.mxu0 0.0
        %712 = vmatpush1.msra.mxu0 0.0
        %713 = vmatprep.subr.mxu0 0.0
        %714 = vmatpush1.msra.mxu0 0.0
        %715 = vmatprep.subr.mxu0 0.0
        %716 = vmatpush1.msra.mxu0 0.0
        %717 = vmatprep.subr.mxu0 0.0
        %718 = vmatpush1.msra.mxu0 0.0
        %719 = vmatprep.subr.mxu0 0.0
        %720 = vmatpush1.msra.mxu0 0.0
        %721 = vmatprep.subr.mxu0 0.0
        %722 = vmatpush1.msra.mxu0 0.0
        %723 = vmatprep.subr.mxu0 0.0
        %724 = vmatpush1.msra.mxu0 0.0
        %725 = vmatprep.subr.mxu0 0.0
        %726 = vmatpush1.msra.mxu0 0.0
        %727 = vmatprep.subr.mxu0 0.0
        %728 = vmatpush1.msra.mxu0 0.0
        %729 = vmatprep.subr.mxu0 0.0
        %730 = vmatpush1.msra.mxu0 0.0
        %731 = vmatprep.subr.mxu0 0.0
        %732 = vmatpush1.msra.mxu0 0.0
        %733 = vmatprep.subr.mxu0 0.0
        %734 = vmatpush1.msra.mxu0 0.0
        %735 = vmatprep.subr.mxu0 0.0
        %736 = vmatpush1.msra.mxu0 0.0
        %737 = vmatprep.subr.mxu0 0.0
        %738 = vmatpush1.msra.mxu0 0.0
        %739 = vmatprep.subr.mxu0 0.0
        %740 = vmatpush1.msra.mxu0 0.0
        %741 = vmatprep.subr.mxu0 0.0
        %742 = vmatpush1.msra.mxu0 0.0
        %743 = vmatprep.subr.mxu0 0.0
        %744 = vmatpush1.msra.mxu0 0.0
        %745 = vmatprep.subr.mxu0 0.0
        %746 = vmatpush1.msra.mxu0 0.0
        %747 = vmatprep.subr.mxu0 0.0
        %748 = vmatpush1.msra.mxu0 0.0
        %749 = vmatprep.subr.mxu0 0.0
        %750 = vmatpush1.msra.mxu0 0.0
        %751 = vmatprep.subr.mxu0 0.0
        %752 = vmatpush1.msra.mxu0 0.0
        %753 = vmatprep.subr.mxu0 0.0
        %754 = vmatpush1.msra.mxu0 0.0
        %755 = vmatprep.subr.mxu0 0.0
        %756 = vmatpush1.msra.mxu0 0.0
        %757 = vmatprep.subr.mxu0 0.0
        %758 = vmatpush1.msra.mxu0 0.0
        %759 = vmatprep.subr.mxu0 0.0
        %760 = vmatpush1.msra.mxu0 0.0
        %761 = vmatprep.subr.mxu0 0.0
        %762 = vmatpush1.msra.mxu0 0.0
        %763 = vmatprep.subr.mxu0 0.0
        %764 = vmatpush1.msra.mxu0 0.0
        %765 = vmatprep.mubr.f32.mxu0 0.0
        %766 = vmatmul.mubr.f32.gmra.mrb[0].mxu0 %v654
        %v767 = vpop.f32.mrb[0].mxu0
        %v768 = vadd.f32 0.0, %v767
        %v769 = vpop.f32.mrb[0].mxu0
        %770 = vmatprep.mubr.f32.mxu0 0.0
        %771 = vmatmul.mubr.f32.gmra.mrb[0].mxu0 %v657
        %v772 = vpop.f32.mrb[0].mxu0
        %v773 = vadd.f32 0.0, %v772
        %v774 = vpop.f32.mrb[0].mxu0
        %775 = vmatprep.mubr.f32.mxu0 0.0
        %776 = vmatmul.mubr.f32.gmra.mrb[0].mxu0 %v660
        %v777 = vpop.f32.mrb[0].mxu0
        %v778 = vadd.f32 0.0, %v777
        %v779 = vpop.f32.mrb[0].mxu0
        %780 = vmatprep.mubr.f32.mxu0 0.0
        %781 = vmatmul.mubr.f32.gmra.mrb[0].mxu0 %v663
        %v782 = vpop.f32.mrb[0].mxu0
        %v783 = vadd.f32 0.0, %v782
        %v784 = vpop.f32.mrb[0].mxu0
        %785 = vmatprep.mubr.f32.mxu0 0.0
        %786 = vmatmul.mubr.f32.gmra.mrb[0].mxu0 %v666
        %v787 = vpop.f32.mrb[0].mxu0
        %v788 = vadd.f32 0.0, %v787
        %v789 = vpop.f32.mrb[0].mxu0
        %790 = vmatprep.mubr.f32.mxu0 0.0
        %791 = vmatmul.mubr.f32.gmra.mrb[0].mxu0 %v669
        %v792 = vpop.f32.mrb[0].mxu0
        %v793 = vadd.f32 0.0, %v792
        %v794 = vpop.f32.mrb[0].mxu0
        %795 = vmatprep.mubr.f32.mxu0 0.0
        %796 = vmatmul.mubr.f32.gmra.mrb[0].mxu0 %v672
        %v797 = vpop.f32.mrb[0].mxu0
        %v798 = vadd.f32 0.0, %v797
        %v799 = vpop.f32.mrb[0].mxu0
        %800 = vmatprep.mubr.f32.mxu0 0.0
        %801 = vmatmul.mubr.f32.gmra.mrb[0].mxu0 %v675
        %v802 = vpop.f32.mrb[0].mxu0
        %v803 = vadd.f32 0.0, %v802
        %v804 = vpop.f32.mrb[0].mxu0
        %805 = vmatprep.mubr.f32.mxu0 0.0
        %806 = vmatmul.mubr.f32.gmra.mrb[0].mxu0 %v678
        %v807 = vpop.f32.mrb[0].mxu0
        %v808 = vadd.f32 0.0, %v807
        %v809 = vpop.f32.mrb[0].mxu0
        %810 = vmatprep.mubr.f32.mxu0 0.0
        %811 = vmatmul.mubr.f32.gmra.mrb[0].mxu0 %v681
        %v812 = vpop.f32.mrb[0].mxu0
        %v813 = vadd.f32 0.0, %v812
        %v814 = vpop.f32.mrb[0].mxu0
        %815 = vmatprep.mubr.f32.mxu0 0.0
        %816 = vmatmul.mubr.f32.gmra.mrb[0].mxu0 %v684
        %v817 = vpop.f32.mrb[0].mxu0
        %v818 = vadd.f32 0.0, %v817
        %v819 = vpop.f32.mrb[0].mxu0
        %820 = vmatprep.mubr.f32.mxu0 0.0
        %821 = vmatmul.mubr.f32.gmra.mrb[0].mxu0 %v687
        %v822 = vpop.f32.mrb[0].mxu0
        %v823 = vadd.f32 0.0, %v822
        %v824 = vpop.f32.mrb[0].mxu0
        %825 = vmatprep.mubr.f32.mxu0 0.0
        %826 = vmatmul.mubr.f32.gmra.mrb[0].mxu0 %v690
        %v827 = vpop.f32.mrb[0].mxu0
        %v828 = vadd.f32 0.0, %v827
        %v829 = vpop.f32.mrb[0].mxu0
        %830 = vmatprep.mubr.f32.mxu0 0.0
        %831 = vmatmul.mubr.f32.gmra.mrb[0].mxu0 %v693
        %v832 = vpop.f32.mrb[0].mxu0
        %v833 = vadd.f32 0.0, %v832
        %v834 = vpop.f32.mrb[0].mxu0
        %835 = vmatprep.mubr.f32.mxu0 0.0
        %836 = vmatmul.mubr.f32.gmra.mrb[0].mxu0 %v696
        %v837 = vpop.f32.mrb[0].mxu0
        %v838 = vadd.f32 0.0, %v837
        %v839 = vpop.f32.mrb[0].mxu0
        %840 = vmatprep.mubr.f32.mxu0 0.0
        %841 = vmatmul.mubr.f32.gmra.mrb[0].mxu0 %v699
        %v842 = vpop.f32.mrb[0].mxu0
        %v843 = vadd.f32 0.0, %v842
        %v844 = vpop.f32.mrb[0].mxu0
        %845 = vdwg.mxu0
        %846 = vxpose.xlu0.b32.start [1/16] %v400, 128
        %847 = vxpose.xlu0.b32.cont [2/16] 0.0, 128
        %848 = vxpose.xlu0.b32.cont [3/16] 0.0, 128
        %849 = vxpose.xlu0.b32.cont [4/16] 0.0, 128
        %850 = vxpose.xlu0.b32.cont [5/16] 0.0, 128
        %851 = vxpose.xlu0.b32.cont [6/16] 0.0, 128
        %852 = vxpose.xlu0.b32.cont [7/16] 0.0, 128
        %853 = vxpose.xlu0.b32.cont [8/16] 0.0, 128
        %854 = vxpose.xlu0.b32.cont [9/16] 0.0, 128
        %855 = vxpose.xlu0.b32.cont [10/16] 0.0, 128
        %856 = vxpose.xlu0.b32.cont [11/16] 0.0, 128
        %857 = vxpose.xlu0.b32.cont [12/16] 0.0, 128
        %858 = vxpose.xlu0.b32.cont [13/16] 0.0, 128
        %859 = vxpose.xlu0.b32.cont [14/16] 0.0, 128
        %860 = vxpose.xlu0.b32.cont [15/16] 0.0, 128
        %861 = vxpose.xlu0.b32.end [16/16] 0.0, 128
        %v862 = vpop.trf.xlu0
        %v863 = vpop.trf.xlu0
        %v864 = vpop.trf.xlu0
        %v865 = vpop.trf.xlu0
        %v866 = vpop.trf.xlu0
        %v867 = vpop.trf.xlu0
        %v868 = vpop.trf.xlu0
        %v869 = vpop.trf.xlu0
        %v870 = vpop.trf.xlu0
        %v871 = vpop.trf.xlu0
        %v872 = vpop.trf.xlu0
        %v873 = vpop.trf.xlu0
        %v874 = vpop.trf.xlu0
        %v875 = vpop.trf.xlu0
        %v876 = vpop.trf.xlu0
        %v877 = vpop.trf.xlu0
        %v879 = vsel %vm652, %v862, 0
        %v882 = vsel %vm652, %v863, 0
        %v885 = vsel %vm652, %v864, 0
        %v888 = vsel %vm652, %v865, 0
        %v891 = vsel %vm652, %v866, 0
        %v894 = vsel %vm652, %v867, 0
        %v897 = vsel %vm652, %v868, 0
        %v900 = vsel %vm652, %v869, 0
        %v903 = vsel %vm652, %v870, 0
        %v906 = vsel %vm652, %v871, 0
        %v909 = vsel %vm652, %v872, 0
        %v912 = vsel %vm652, %v873, 0
        %v915 = vsel %vm652, %v874, 0
        %v918 = vsel %vm652, %v875, 0
        %v921 = vsel %vm652, %v876, 0
        %v924 = vsel %vm652, %v877, 0
        %926 = vmatprep.subr.mxu0 0.0
        %927 = vmatpush1.msra.mxu0 %v500
        %928 = vmatprep.subr.mxu0 0.0
        %929 = vmatpush1.msra.mxu0 0.0
        %930 = vmatprep.subr.mxu0 0.0
        %931 = vmatpush1.msra.mxu0 0.0
        %932 = vmatprep.subr.mxu0 0.0
        %933 = vmatpush1.msra.mxu0 0.0
        %934 = vmatprep.subr.mxu0 0.0
        %935 = vmatpush1.msra.mxu0 0.0
        %936 = vmatprep.subr.mxu0 0.0
        %937 = vmatpush1.msra.mxu0 0.0
        %938 = vmatprep.subr.mxu0 0.0
        %939 = vmatpush1.msra.mxu0 0.0
        %940 = vmatprep.subr.mxu0 0.0
        %941 = vmatpush1.msra.mxu0 0.0
        %942 = vmatprep.subr.mxu0 0.0
        %943 = vmatpush1.msra.mxu0 0.0
        %944 = vmatprep.subr.mxu0 0.0
        %945 = vmatpush1.msra.mxu0 0.0
        %946 = vmatprep.subr.mxu0 0.0
        %947 = vmatpush1.msra.mxu0 0.0
        %948 = vmatprep.subr.mxu0 0.0
        %949 = vmatpush1.msra.mxu0 0.0
        %950 = vmatprep.subr.mxu0 0.0
        %951 = vmatpush1.msra.mxu0 0.0
        %952 = vmatprep.subr.mxu0 0.0
        %953 = vmatpush1.msra.mxu0 0.0
        %954 = vmatprep.subr.mxu0 0.0
        %955 = vmatpush1.msra.mxu0 0.0
        %956 = vmatprep.subr.mxu0 0.0
        %957 = vmatpush1.msra.mxu0 0.0
        %958 = vmatprep.subr.mxu0 0.0
        %959 = vmatpush1.msra.mxu0 0.0
        %960 = vmatprep.subr.mxu0 0.0
        %961 = vmatpush1.msra.mxu0 0.0
        %962 = vmatprep.subr.mxu0 0.0
        %963 = vmatpush1.msra.mxu0 0.0
        %964 = vmatprep.subr.mxu0 0.0
        %965 = vmatpush1.msra.mxu0 0.0
        %966 = vmatprep.subr.mxu0 0.0
        %967 = vmatpush1.msra.mxu0 0.0
        %968 = vmatprep.subr.mxu0 0.0
        %969 = vmatpush1.msra.mxu0 0.0
        %970 = vmatprep.subr.mxu0 0.0
        %971 = vmatpush1.msra.mxu0 0.0
        %972 = vmatprep.subr.mxu0 0.0
        %973 = vmatpush1.msra.mxu0 0.0
        %974 = vmatprep.subr.mxu0 0.0
        %975 = vmatpush1.msra.mxu0 0.0
        %976 = vmatprep.subr.mxu0 0.0
        %977 = vmatpush1.msra.mxu0 0.0
        %978 = vmatprep.subr.mxu0 0.0
        %979 = vmatpush1.msra.mxu0 0.0
        %980 = vmatprep.subr.mxu0 0.0
        %981 = vmatpush1.msra.mxu0 0.0
        %982 = vmatprep.subr.mxu0 0.0
        %983 = vmatpush1.msra.mxu0 0.0
        %984 = vmatprep.subr.mxu0 0.0
        %985 = vmatpush1.msra.mxu0 0.0
        %986 = vmatprep.subr.mxu0 0.0
        %987 = vmatpush1.msra.mxu0 0.0
        %988 = vmatprep.subr.mxu0 0.0
        %989 = vmatpush1.msra.mxu0 0.0
        %990 = vmatprep.mubr.f32.mxu0 0.0
        %991 = vmatmul.mubr.f32.gmra.mrb[0].mxu0 %v879
        %v992 = vpop.f32.mrb[0].mxu0
        %v993 = vadd.f32 0.0, %v992
        %v994 = vpop.f32.mrb[0].mxu0
        %995 = vmatprep.mubr.f32.mxu0 0.0
        %996 = vmatmul.mubr.f32.gmra.mrb[0].mxu0 %v882
        %v997 = vpop.f32.mrb[0].mxu0
        %v998 = vadd.f32 0.0, %v997
        %v999 = vpop.f32.mrb[0].mxu0
        %1000 = vmatprep.mubr.f32.mxu0 0.0
        %1001 = vmatmul.mubr.f32.gmra.mrb[0].mxu0 %v885
        %v1002 = vpop.f32.mrb[0].mxu0
        %v1003 = vadd.f32 0.0, %v1002
        %v1004 = vpop.f32.mrb[0].mxu0
        %1005 = vmatprep.mubr.f32.mxu0 0.0
        %1006 = vmatmul.mubr.f32.gmra.mrb[0].mxu0 %v888
        %v1007 = vpop.f32.mrb[0].mxu0
        %v1008 = vadd.f32 0.0, %v1007
        %v1009 = vpop.f32.mrb[0].mxu0
        %1010 = vmatprep.mubr.f32.mxu0 0.0
        %1011 = vmatmul.mubr.f32.gmra.mrb[0].mxu0 %v891
        %v1012 = vpop.f32.mrb[0].mxu0
        %v1013 = vadd.f32 0.0, %v1012
        %v1014 = vpop.f32.mrb[0].mxu0
        %1015 = vmatprep.mubr.f32.mxu0 0.0
        %1016 = vmatmul.mubr.f32.gmra.mrb[0].mxu0 %v894
        %v1017 = vpop.f32.mrb[0].mxu0
        %v1018 = vadd.f32 0.0, %v1017
        %v1019 = vpop.f32.mrb[0].mxu0
        %1020 = vmatprep.mubr.f32.mxu0 0.0
        %1021 = vmatmul.mubr.f32.gmra.mrb[0].mxu0 %v897
        %v1022 = vpop.f32.mrb[0].mxu0
        %v1023 = vadd.f32 0.0, %v1022
        %v1024 = vpop.f32.mrb[0].mxu0
        %1025 = vmatprep.mubr.f32.mxu0 0.0
        %1026 = vmatmul.mubr.f32.gmra.mrb[0].mxu0 %v900
        %v1027 = vpop.f32.mrb[0].mxu0
        %v1028 = vadd.f32 0.0, %v1027
        %v1029 = vpop.f32.mrb[0].mxu0
        %1030 = vmatprep.mubr.f32.mxu0 0.0
        %1031 = vmatmul.mubr.f32.gmra.mrb[0].mxu0 %v903
        %v1032 = vpop.f32.mrb[0].mxu0
        %v1033 = vadd.f32 0.0, %v1032
        %v1034 = vpop.f32.mrb[0].mxu0
        %1035 = vmatprep.mubr.f32.mxu0 0.0
        %1036 = vmatmul.mubr.f32.gmra.mrb[0].mxu0 %v906
        %v1037 = vpop.f32.mrb[0].mxu0
        %v1038 = vadd.f32 0.0, %v1037
        %v1039 = vpop.f32.mrb[0].mxu0
        %1040 = vmatprep.mubr.f32.mxu0 0.0
        %1041 = vmatmul.mubr.f32.gmra.mrb[0].mxu0 %v909
        %v1042 = vpop.f32.mrb[0].mxu0
        %v1043 = vadd.f32 0.0, %v1042
        %v1044 = vpop.f32.mrb[0].mxu0
        %1045 = vmatprep.mubr.f32.mxu0 0.0
        %1046 = vmatmul.mubr.f32.gmra.mrb[0].mxu0 %v912
        %v1047 = vpop.f32.mrb[0].mxu0
        %v1048 = vadd.f32 0.0, %v1047
        %v1049 = vpop.f32.mrb[0].mxu0
        %1050 = vmatprep.mubr.f32.mxu0 0.0
        %1051 = vmatmul.mubr.f32.gmra.mrb[0].mxu0 %v915
        %v1052 = vpop.f32.mrb[0].mxu0
        %v1053 = vadd.f32 0.0, %v1052
        %v1054 = vpop.f32.mrb[0].mxu0
        %1055 = vmatprep.mubr.f32.mxu0 0.0
        %1056 = vmatmul.mubr.f32.gmra.mrb[0].mxu0 %v918
        %v1057 = vpop.f32.mrb[0].mxu0
        %v1058 = vadd.f32 0.0, %v1057
        %v1059 = vpop.f32.mrb[0].mxu0
        %1060 = vmatprep.mubr.f32.mxu0 0.0
        %1061 = vmatmul.mubr.f32.gmra.mrb[0].mxu0 %v921
        %v1062 = vpop.f32.mrb[0].mxu0
        %v1063 = vadd.f32 0.0, %v1062
        %v1064 = vpop.f32.mrb[0].mxu0
        %1065 = vmatprep.mubr.f32.mxu0 0.0
        %1066 = vmatmul.mubr.f32.gmra.mrb[0].mxu0 %v924
        %v1067 = vpop.f32.mrb[0].mxu0
        %v1068 = vadd.f32 0.0, %v1067
        %v1069 = vpop.f32.mrb[0].mxu0
        %1070 = vdwg.mxu0
        %v1071 = vld [vmem:[%s1] sm:$0xff]
        %v1072 = vld [vmem:[%s1 + $0x8] sm:$0xff]
        %v1073 = vld [vmem:[%s1 + $0x10] sm:$0xff]
        %v1074 = vld [vmem:[%s1 + $0x18] sm:$0xff]
        %v1075 = vld [vmem:[%s1 + $0x20] sm:$0xff]
        %v1076 = vld [vmem:[%s1 + $0x28] sm:$0xff]
        %v1077 = vld [vmem:[%s1 + $0x30] sm:$0xff]
        %v1078 = vld [vmem:[%s1 + $0x38] sm:$0xff]
        %v1079 = vld [vmem:[%s1 + $0x40] sm:$0xff]
        %v1080 = vld [vmem:[%s1 + $0x48] sm:$0xff]
        %v1081 = vld [vmem:[%s1 + $0x50] sm:$0xff]
        %v1082 = vld [vmem:[%s1 + $0x58] sm:$0xff]
        %v1083 = vld [vmem:[%s1 + $0x60] sm:$0xff]
        %v1084 = vld [vmem:[%s1 + $0x68] sm:$0xff]
        %v1085 = vld [vmem:[%s1 + $0x70] sm:$0xff]
        %v1086 = vld [vmem:[%s1 + $0x78] sm:$0xff]
        %v1087 = vmul.f32 %v401, %v1071
        %v1088 = vmul.f32 %v402, %v1072
        %v1089 = vmul.f32 %v403, %v1073
        %v1090 = vmul.f32 %v404, %v1074
        %v1091 = vmul.f32 %v405, %v1075
        %v1092 = vmul.f32 %v406, %v1076
        %v1093 = vmul.f32 %v407, %v1077
        %v1094 = vmul.f32 %v408, %v1078
        %v1095 = vmul.f32 %v409, %v1079
        %v1096 = vmul.f32 %v410, %v1080
        %v1097 = vmul.f32 %v411, %v1081
        %v1098 = vmul.f32 %v412, %v1082
        %v1099 = vmul.f32 %v413, %v1083
        %v1100 = vmul.f32 %v414, %v1084
        %v1101 = vmul.f32 %v415, %v1085
        %v1102 = vmul.f32 %v416, %v1086
        %v1103 = vlaneseq
        %v1104 = vshrl.u32 %v1103, 7
        %v1105 = vsub.s32 0, %v1104
        %v1106 = vrot.slane %v394, %v1105
        %v1107 = vmul.f32 %v768, %v1106
        %v1108 = vmul.f32 %v773, %v1106
        %v1109 = vmul.f32 %v778, %v1106
        %v1110 = vmul.f32 %v783, %v1106
        %v1111 = vmul.f32 %v788, %v1106
        %v1112 = vmul.f32 %v793, %v1106
        %v1113 = vmul.f32 %v798, %v1106
        %v1114 = vmul.f32 %v803, %v1106
        %v1115 = vmul.f32 %v808, %v1106
        %v1116 = vmul.f32 %v813, %v1106
        %v1117 = vmul.f32 %v818, %v1106
        %v1118 = vmul.f32 %v823, %v1106
        %v1119 = vmul.f32 %v828, %v1106
        %v1120 = vmul.f32 %v833, %v1106
        %v1121 = vmul.f32 %v838, %v1106
        %v1122 = vmul.f32 %v843, %v1106
        %v1123 = vadd.f32 %v1087, %v1107
        %v1124 = vadd.f32 %v1088, %v1108
        %v1125 = vadd.f32 %v1089, %v1109
        %v1126 = vadd.f32 %v1090, %v1110
        %v1127 = vadd.f32 %v1091, %v1111
        %v1128 = vadd.f32 %v1092, %v1112
        %v1129 = vadd.f32 %v1093, %v1113
        %v1130 = vadd.f32 %v1094, %v1114
        %v1131 = vadd.f32 %v1095, %v1115
        %v1132 = vadd.f32 %v1096, %v1116
        %v1133 = vadd.f32 %v1097, %v1117
        %v1134 = vadd.f32 %v1098, %v1118
        %v1135 = vadd.f32 %v1099, %v1119
        %v1136 = vadd.f32 %v1100, %v1120
        %v1137 = vadd.f32 %v1101, %v1121
        %v1138 = vadd.f32 %v1102, %v1122
        %v1139 = vmul.f32 %v417, %v1071
        %v1140 = vmul.f32 %v418, %v1072
        %v1141 = vmul.f32 %v419, %v1073
        %v1142 = vmul.f32 %v420, %v1074
        %v1143 = vmul.f32 %v421, %v1075
        %v1144 = vmul.f32 %v422, %v1076
        %v1145 = vmul.f32 %v423, %v1077
        %v1146 = vmul.f32 %v424, %v1078
        %v1147 = vmul.f32 %v425, %v1079
        %v1148 = vmul.f32 %v426, %v1080
        %v1149 = vmul.f32 %v427, %v1081
        %v1150 = vmul.f32 %v428, %v1082
        %v1151 = vmul.f32 %v429, %v1083
        %v1152 = vmul.f32 %v430, %v1084
        %v1153 = vmul.f32 %v431, %v1085
        %v1154 = vmul.f32 %v432, %v1086
        %v1155 = vmul.f32 %v993, %v1106
        %v1156 = vmul.f32 %v998, %v1106
        %v1157 = vmul.f32 %v1003, %v1106
        %v1158 = vmul.f32 %v1008, %v1106
        %v1159 = vmul.f32 %v1013, %v1106
        %v1160 = vmul.f32 %v1018, %v1106
        %v1161 = vmul.f32 %v1023, %v1106
        %v1162 = vmul.f32 %v1028, %v1106
        %v1163 = vmul.f32 %v1033, %v1106
        %v1164 = vmul.f32 %v1038, %v1106
        %v1165 = vmul.f32 %v1043, %v1106
        %v1166 = vmul.f32 %v1048, %v1106
        %v1167 = vmul.f32 %v1053, %v1106
        %v1168 = vmul.f32 %v1058, %v1106
        %v1169 = vmul.f32 %v1063, %v1106
        %v1170 = vmul.f32 %v1068, %v1106
        %v1171 = vadd.f32 %v1139, %v1155
        %v1172 = vadd.f32 %v1140, %v1156
        %v1173 = vadd.f32 %v1141, %v1157
        %v1174 = vadd.f32 %v1142, %v1158
        %v1175 = vadd.f32 %v1143, %v1159
        %v1176 = vadd.f32 %v1144, %v1160
        %v1177 = vadd.f32 %v1145, %v1161
        %v1178 = vadd.f32 %v1146, %v1162
        %v1179 = vadd.f32 %v1147, %v1163
        %v1180 = vadd.f32 %v1148, %v1164
        %v1181 = vadd.f32 %v1149, %v1165
        %v1182 = vadd.f32 %v1150, %v1166
        %v1183 = vadd.f32 %v1151, %v1167
        %v1184 = vadd.f32 %v1152, %v1168
        %v1185 = vadd.f32 %v1153, %v1169
        %v1186 = vadd.f32 %v1154, %v1170
        %v1187 = vld [vmem:[%s2] sm:$0xff]
        %v1188 = vld [vmem:[%s2 + $0x8] sm:$0xff]
        %v1189 = vld [vmem:[%s2 + $0x10] sm:$0xff]
        %v1190 = vld [vmem:[%s2 + $0x18] sm:$0xff]
        %v1191 = vld [vmem:[%s2 + $0x20] sm:$0xff]
        %v1192 = vld [vmem:[%s2 + $0x28] sm:$0xff]
        %v1193 = vld [vmem:[%s2 + $0x30] sm:$0xff]
        %v1194 = vld [vmem:[%s2 + $0x38] sm:$0xff]
        %v1195 = vld [vmem:[%s2 + $0x40] sm:$0xff]
        %v1196 = vld [vmem:[%s2 + $0x48] sm:$0xff]
        %v1197 = vld [vmem:[%s2 + $0x50] sm:$0xff]
        %v1198 = vld [vmem:[%s2 + $0x58] sm:$0xff]
        %v1199 = vld [vmem:[%s2 + $0x60] sm:$0xff]
        %v1200 = vld [vmem:[%s2 + $0x68] sm:$0xff]
        %v1201 = vld [vmem:[%s2 + $0x70] sm:$0xff]
        %v1202 = vld [vmem:[%s2 + $0x78] sm:$0xff]
        %v1203 = vmul.f32 %v1123, %v1123
        %v1204 = vmul.f32 %v1124, %v1124
        %v1205 = vmul.f32 %v1125, %v1125
        %v1206 = vmul.f32 %v1126, %v1126
        %v1207 = vmul.f32 %v1127, %v1127
        %v1208 = vmul.f32 %v1128, %v1128
        %v1209 = vmul.f32 %v1129, %v1129
        %v1210 = vmul.f32 %v1130, %v1130
        %v1211 = vmul.f32 %v1131, %v1131
        %v1212 = vmul.f32 %v1132, %v1132
        %v1213 = vmul.f32 %v1133, %v1133
        %v1214 = vmul.f32 %v1134, %v1134
        %v1215 = vmul.f32 %v1135, %v1135
        %v1216 = vmul.f32 %v1136, %v1136
        %v1217 = vmul.f32 %v1137, %v1137
        %v1218 = vmul.f32 %v1138, %v1138
        %1219 = vmatprep.subr.mxu0 0.0
        %1220 = vmatpush1.msra.mxu0 %v1187
        %1221 = vmatprep.subr.mxu0 0.0
        %1222 = vmatpush1.msra.mxu0 %v1188
        %1223 = vmatprep.subr.mxu0 0.0
        %1224 = vmatpush1.msra.mxu0 %v1189
        %1225 = vmatprep.subr.mxu0 0.0
        %1226 = vmatpush1.msra.mxu0 %v1190
        %1227 = vmatprep.subr.mxu0 0.0
        %1228 = vmatpush1.msra.mxu0 %v1191
        %1229 = vmatprep.subr.mxu0 0.0
        %1230 = vmatpush1.msra.mxu0 %v1192
        %1231 = vmatprep.subr.mxu0 0.0
        %1232 = vmatpush1.msra.mxu0 %v1193
        %1233 = vmatprep.subr.mxu0 0.0
        %1234 = vmatpush1.msra.mxu0 %v1194
        %1235 = vmatprep.subr.mxu0 0.0
        %1236 = vmatpush1.msra.mxu0 %v1195
        %1237 = vmatprep.subr.mxu0 0.0
        %1238 = vmatpush1.msra.mxu0 %v1196
        %1239 = vmatprep.subr.mxu0 0.0
        %1240 = vmatpush1.msra.mxu0 %v1197
        %1241 = vmatprep.subr.mxu0 0.0
        %1242 = vmatpush1.msra.mxu0 %v1198
        %1243 = vmatprep.subr.mxu0 0.0
        %1244 = vmatpush1.msra.mxu0 %v1199
        %1245 = vmatprep.subr.mxu0 0.0
        %1246 = vmatpush1.msra.mxu0 %v1200
        %1247 = vmatprep.subr.mxu0 0.0
        %1248 = vmatpush1.msra.mxu0 %v1201
        %1249 = vmatprep.subr.mxu0 0.0
        %1250 = vmatpush1.msra.mxu0 %v1202
        %1251 = vmatprep.subr.mxu0 0.0
        %1252 = vmatpush1.msra.mxu0 0.0
        %1253 = vmatprep.subr.mxu0 0.0
        %1254 = vmatpush1.msra.mxu0 0.0
        %1255 = vmatprep.subr.mxu0 0.0
        %1256 = vmatpush1.msra.mxu0 0.0
        %1257 = vmatprep.subr.mxu0 0.0
        %1258 = vmatpush1.msra.mxu0 0.0
        %1259 = vmatprep.subr.mxu0 0.0
        %1260 = vmatpush1.msra.mxu0 0.0
        %1261 = vmatprep.subr.mxu0 0.0
        %1262 = vmatpush1.msra.mxu0 0.0
        %1263 = vmatprep.subr.mxu0 0.0
        %1264 = vmatpush1.msra.mxu0 0.0
        %1265 = vmatprep.subr.mxu0 0.0
        %1266 = vmatpush1.msra.mxu0 0.0
        %1267 = vmatprep.subr.mxu0 0.0
        %1268 = vmatpush1.msra.mxu0 0.0
        %1269 = vmatprep.subr.mxu0 0.0
        %1270 = vmatpush1.msra.mxu0 0.0
        %1271 = vmatprep.subr.mxu0 0.0
        %1272 = vmatpush1.msra.mxu0 0.0
        %1273 = vmatprep.subr.mxu0 0.0
        %1274 = vmatpush1.msra.mxu0 0.0
        %1275 = vmatprep.subr.mxu0 0.0
        %1276 = vmatpush1.msra.mxu0 0.0
        %1277 = vmatprep.subr.mxu0 0.0
        %1278 = vmatpush1.msra.mxu0 0.0
        %1279 = vmatprep.subr.mxu0 0.0
        %1280 = vmatpush1.msra.mxu0 0.0
        %1281 = vmatprep.subr.mxu0 0.0
        %1282 = vmatpush1.msra.mxu0 0.0
        %1283 = vmatprep.mubr.f32.mxu0 0.0
        %1284 = vmatmul.mubr.f32.gmra.mrb[0].mxu0 %v1203
        %v1285 = vpop.f32.mrb[0].mxu0
        %v1286 = vadd.f32 0.0, %v1285
        %v1287 = vpop.f32.mrb[0].mxu0
        %1288 = vmatprep.mubr.f32.mxu0 0.0
        %1289 = vmatmul.mubr.f32.gmra.mrb[0].mxu0 %v1204
        %v1290 = vpop.f32.mrb[0].mxu0
        %v1291 = vadd.f32 0.0, %v1290
        %v1292 = vpop.f32.mrb[0].mxu0
        %1293 = vmatprep.mubr.f32.mxu0 0.0
        %1294 = vmatmul.mubr.f32.gmra.mrb[0].mxu0 %v1205
        %v1295 = vpop.f32.mrb[0].mxu0
        %v1296 = vadd.f32 0.0, %v1295
        %v1297 = vpop.f32.mrb[0].mxu0
        %1298 = vmatprep.mubr.f32.mxu0 0.0
        %1299 = vmatmul.mubr.f32.gmra.mrb[0].mxu0 %v1206
        %v1300 = vpop.f32.mrb[0].mxu0
        %v1301 = vadd.f32 0.0, %v1300
        %v1302 = vpop.f32.mrb[0].mxu0
        %1303 = vmatprep.mubr.f32.mxu0 0.0
        %1304 = vmatmul.mubr.f32.gmra.mrb[0].mxu0 %v1207
        %v1305 = vpop.f32.mrb[0].mxu0
        %v1306 = vadd.f32 0.0, %v1305
        %v1307 = vpop.f32.mrb[0].mxu0
        %1308 = vmatprep.mubr.f32.mxu0 0.0
        %1309 = vmatmul.mubr.f32.gmra.mrb[0].mxu0 %v1208
        %v1310 = vpop.f32.mrb[0].mxu0
        %v1311 = vadd.f32 0.0, %v1310
        %v1312 = vpop.f32.mrb[0].mxu0
        %1313 = vmatprep.mubr.f32.mxu0 0.0
        %1314 = vmatmul.mubr.f32.gmra.mrb[0].mxu0 %v1209
        %v1315 = vpop.f32.mrb[0].mxu0
        %v1316 = vadd.f32 0.0, %v1315
        %v1317 = vpop.f32.mrb[0].mxu0
        %1318 = vmatprep.mubr.f32.mxu0 0.0
        %1319 = vmatmul.mubr.f32.gmra.mrb[0].mxu0 %v1210
        %v1320 = vpop.f32.mrb[0].mxu0
        %v1321 = vadd.f32 0.0, %v1320
        %v1322 = vpop.f32.mrb[0].mxu0
        %1323 = vmatprep.mubr.f32.mxu0 0.0
        %1324 = vmatmul.mubr.f32.gmra.mrb[0].mxu0 %v1211
        %v1325 = vpop.f32.mrb[0].mxu0
        %v1326 = vadd.f32 0.0, %v1325
        %v1327 = vpop.f32.mrb[0].mxu0
        %1328 = vmatprep.mubr.f32.mxu0 0.0
        %1329 = vmatmul.mubr.f32.gmra.mrb[0].mxu0 %v1212
        %v1330 = vpop.f32.mrb[0].mxu0
        %v1331 = vadd.f32 0.0, %v1330
        %v1332 = vpop.f32.mrb[0].mxu0
        %1333 = vmatprep.mubr.f32.mxu0 0.0
        %1334 = vmatmul.mubr.f32.gmra.mrb[0].mxu0 %v1213
        %v1335 = vpop.f32.mrb[0].mxu0
        %v1336 = vadd.f32 0.0, %v1335
        %v1337 = vpop.f32.mrb[0].mxu0
        %1338 = vmatprep.mubr.f32.mxu0 0.0
        %1339 = vmatmul.mubr.f32.gmra.mrb[0].mxu0 %v1214
        %v1340 = vpop.f32.mrb[0].mxu0
        %v1341 = vadd.f32 0.0, %v1340
        %v1342 = vpop.f32.mrb[0].mxu0
        %1343 = vmatprep.mubr.f32.mxu0 0.0
        %1344 = vmatmul.mubr.f32.gmra.mrb[0].mxu0 %v1215
        %v1345 = vpop.f32.mrb[0].mxu0
        %v1346 = vadd.f32 0.0, %v1345
        %v1347 = vpop.f32.mrb[0].mxu0
        %1348 = vmatprep.mubr.f32.mxu0 0.0
        %1349 = vmatmul.mubr.f32.gmra.mrb[0].mxu0 %v1216
        %v1350 = vpop.f32.mrb[0].mxu0
        %v1351 = vadd.f32 0.0, %v1350
        %v1352 = vpop.f32.mrb[0].mxu0
        %1353 = vmatprep.mubr.f32.mxu0 0.0
        %1354 = vmatmul.mubr.f32.gmra.mrb[0].mxu0 %v1217
        %v1355 = vpop.f32.mrb[0].mxu0
        %v1356 = vadd.f32 0.0, %v1355
        %v1357 = vpop.f32.mrb[0].mxu0
        %1358 = vmatprep.mubr.f32.mxu0 0.0
        %1359 = vmatmul.mubr.f32.gmra.mrb[0].mxu0 %v1218
        %v1360 = vpop.f32.mrb[0].mxu0
        %v1361 = vadd.f32 0.0, %v1360
        %v1362 = vpop.f32.mrb[0].mxu0
        %1363 = vdwg.mxu0
        %v1364 = vmul.f32 %v1171, %v1171
        %v1365 = vmul.f32 %v1172, %v1172
        %v1366 = vmul.f32 %v1173, %v1173
        %v1367 = vmul.f32 %v1174, %v1174
        %v1368 = vmul.f32 %v1175, %v1175
        %v1369 = vmul.f32 %v1176, %v1176
        %v1370 = vmul.f32 %v1177, %v1177
        %v1371 = vmul.f32 %v1178, %v1178
        %v1372 = vmul.f32 %v1179, %v1179
        %v1373 = vmul.f32 %v1180, %v1180
        %v1374 = vmul.f32 %v1181, %v1181
        %v1375 = vmul.f32 %v1182, %v1182
        %v1376 = vmul.f32 %v1183, %v1183
        %v1377 = vmul.f32 %v1184, %v1184
        %v1378 = vmul.f32 %v1185, %v1185
        %v1379 = vmul.f32 %v1186, %v1186
        %1380 = vmatprep.subr.mxu0 0.0
        %1381 = vmatpush1.msra.mxu0 %v1187
        %1382 = vmatprep.subr.mxu0 0.0
        %1383 = vmatpush1.msra.mxu0 %v1188
        %1384 = vmatprep.subr.mxu0 0.0
        %1385 = vmatpush1.msra.mxu0 %v1189
        %1386 = vmatprep.subr.mxu0 0.0
        %1387 = vmatpush1.msra.mxu0 %v1190
        %1388 = vmatprep.subr.mxu0 0.0
        %1389 = vmatpush1.msra.mxu0 %v1191
        %1390 = vmatprep.subr.mxu0 0.0
        %1391 = vmatpush1.msra.mxu0 %v1192
        %1392 = vmatprep.subr.mxu0 0.0
        %1393 = vmatpush1.msra.mxu0 %v1193
        %1394 = vmatprep.subr.mxu0 0.0
        %1395 = vmatpush1.msra.mxu0 %v1194
        %1396 = vmatprep.subr.mxu0 0.0
        %1397 = vmatpush1.msra.mxu0 %v1195
        %1398 = vmatprep.subr.mxu0 0.0
        %1399 = vmatpush1.msra.mxu0 %v1196
        %1400 = vmatprep.subr.mxu0 0.0
        %1401 = vmatpush1.msra.mxu0 %v1197
        %1402 = vmatprep.subr.mxu0 0.0
        %1403 = vmatpush1.msra.mxu0 %v1198
        %1404 = vmatprep.subr.mxu0 0.0
        %1405 = vmatpush1.msra.mxu0 %v1199
        %1406 = vmatprep.subr.mxu0 0.0
        %1407 = vmatpush1.msra.mxu0 %v1200
        %1408 = vmatprep.subr.mxu0 0.0
        %1409 = vmatpush1.msra.mxu0 %v1201
        %1410 = vmatprep.subr.mxu0 0.0
        %1411 = vmatpush1.msra.mxu0 %v1202
        %1412 = vmatprep.subr.mxu0 0.0
        %1413 = vmatpush1.msra.mxu0 0.0
        %1414 = vmatprep.subr.mxu0 0.0
        %1415 = vmatpush1.msra.mxu0 0.0
        %1416 = vmatprep.subr.mxu0 0.0
        %1417 = vmatpush1.msra.mxu0 0.0
        %1418 = vmatprep.subr.mxu0 0.0
        %1419 = vmatpush1.msra.mxu0 0.0
        %1420 = vmatprep.subr.mxu0 0.0
        %1421 = vmatpush1.msra.mxu0 0.0
        %1422 = vmatprep.subr.mxu0 0.0
        %1423 = vmatpush1.msra.mxu0 0.0
        %1424 = vmatprep.subr.mxu0 0.0
        %1425 = vmatpush1.msra.mxu0 0.0
        %1426 = vmatprep.subr.mxu0 0.0
        %1427 = vmatpush1.msra.mxu0 0.0
        %1428 = vmatprep.subr.mxu0 0.0
        %1429 = vmatpush1.msra.mxu0 0.0
        %1430 = vmatprep.subr.mxu0 0.0
        %1431 = vmatpush1.msra.mxu0 0.0
        %1432 = vmatprep.subr.mxu0 0.0
        %1433 = vmatpush1.msra.mxu0 0.0
        %1434 = vmatprep.subr.mxu0 0.0
        %1435 = vmatpush1.msra.mxu0 0.0
        %1436 = vmatprep.subr.mxu0 0.0
        %1437 = vmatpush1.msra.mxu0 0.0
        %1438 = vmatprep.subr.mxu0 0.0
        %1439 = vmatpush1.msra.mxu0 0.0
        %1440 = vmatprep.subr.mxu0 0.0
        %1441 = vmatpush1.msra.mxu0 0.0
        %1442 = vmatprep.subr.mxu0 0.0
        %1443 = vmatpush1.msra.mxu0 0.0
        %1444 = vmatprep.mubr.f32.mxu0 0.0
        %1445 = vmatmul.mubr.f32.gmra.mrb[0].mxu0 %v1364
        %v1446 = vpop.f32.mrb[0].mxu0
        %v1447 = vadd.f32 0.0, %v1446
        %v1448 = vpop.f32.mrb[0].mxu0
        %1449 = vmatprep.mubr.f32.mxu0 0.0
        %1450 = vmatmul.mubr.f32.gmra.mrb[0].mxu0 %v1365
        %v1451 = vpop.f32.mrb[0].mxu0
        %v1452 = vadd.f32 0.0, %v1451
        %v1453 = vpop.f32.mrb[0].mxu0
        %1454 = vmatprep.mubr.f32.mxu0 0.0
        %1455 = vmatmul.mubr.f32.gmra.mrb[0].mxu0 %v1366
        %v1456 = vpop.f32.mrb[0].mxu0
        %v1457 = vadd.f32 0.0, %v1456
        %v1458 = vpop.f32.mrb[0].mxu0
        %1459 = vmatprep.mubr.f32.mxu0 0.0
        %1460 = vmatmul.mubr.f32.gmra.mrb[0].mxu0 %v1367
        %v1461 = vpop.f32.mrb[0].mxu0
        %v1462 = vadd.f32 0.0, %v1461
        %v1463 = vpop.f32.mrb[0].mxu0
        %1464 = vmatprep.mubr.f32.mxu0 0.0
        %1465 = vmatmul.mubr.f32.gmra.mrb[0].mxu0 %v1368
        %v1466 = vpop.f32.mrb[0].mxu0
        %v1467 = vadd.f32 0.0, %v1466
        %v1468 = vpop.f32.mrb[0].mxu0
        %1469 = vmatprep.mubr.f32.mxu0 0.0
        %1470 = vmatmul.mubr.f32.gmra.mrb[0].mxu0 %v1369
        %v1471 = vpop.f32.mrb[0].mxu0
        %v1472 = vadd.f32 0.0, %v1471
        %v1473 = vpop.f32.mrb[0].mxu0
        %1474 = vmatprep.mubr.f32.mxu0 0.0
        %1475 = vmatmul.mubr.f32.gmra.mrb[0].mxu0 %v1370
        %v1476 = vpop.f32.mrb[0].mxu0
        %v1477 = vadd.f32 0.0, %v1476
        %v1478 = vpop.f32.mrb[0].mxu0
        %1479 = vmatprep.mubr.f32.mxu0 0.0
        %1480 = vmatmul.mubr.f32.gmra.mrb[0].mxu0 %v1371
        %v1481 = vpop.f32.mrb[0].mxu0
        %v1482 = vadd.f32 0.0, %v1481
        %v1483 = vpop.f32.mrb[0].mxu0
        %1484 = vmatprep.mubr.f32.mxu0 0.0
        %1485 = vmatmul.mubr.f32.gmra.mrb[0].mxu0 %v1372
        %v1486 = vpop.f32.mrb[0].mxu0
        %v1487 = vadd.f32 0.0, %v1486
        %v1488 = vpop.f32.mrb[0].mxu0
        %1489 = vmatprep.mubr.f32.mxu0 0.0
        %1490 = vmatmul.mubr.f32.gmra.mrb[0].mxu0 %v1373
        %v1491 = vpop.f32.mrb[0].mxu0
        %v1492 = vadd.f32 0.0, %v1491
        %v1493 = vpop.f32.mrb[0].mxu0
        %1494 = vmatprep.mubr.f32.mxu0 0.0
        %1495 = vmatmul.mubr.f32.gmra.mrb[0].mxu0 %v1374
        %v1496 = vpop.f32.mrb[0].mxu0
        %v1497 = vadd.f32 0.0, %v1496
        %v1498 = vpop.f32.mrb[0].mxu0
        %1499 = vmatprep.mubr.f32.mxu0 0.0
        %1500 = vmatmul.mubr.f32.gmra.mrb[0].mxu0 %v1375
        %v1501 = vpop.f32.mrb[0].mxu0
        %v1502 = vadd.f32 0.0, %v1501
        %v1503 = vpop.f32.mrb[0].mxu0
        %1504 = vmatprep.mubr.f32.mxu0 0.0
        %1505 = vmatmul.mubr.f32.gmra.mrb[0].mxu0 %v1376
        %v1506 = vpop.f32.mrb[0].mxu0
        %v1507 = vadd.f32 0.0, %v1506
        %v1508 = vpop.f32.mrb[0].mxu0
        %1509 = vmatprep.mubr.f32.mxu0 0.0
        %1510 = vmatmul.mubr.f32.gmra.mrb[0].mxu0 %v1377
        %v1511 = vpop.f32.mrb[0].mxu0
        %v1512 = vadd.f32 0.0, %v1511
        %v1513 = vpop.f32.mrb[0].mxu0
        %1514 = vmatprep.mubr.f32.mxu0 0.0
        %1515 = vmatmul.mubr.f32.gmra.mrb[0].mxu0 %v1378
        %v1516 = vpop.f32.mrb[0].mxu0
        %v1517 = vadd.f32 0.0, %v1516
        %v1518 = vpop.f32.mrb[0].mxu0
        %1519 = vmatprep.mubr.f32.mxu0 0.0
        %1520 = vmatmul.mubr.f32.gmra.mrb[0].mxu0 %v1379
        %v1521 = vpop.f32.mrb[0].mxu0
        %v1522 = vadd.f32 0.0, %v1521
        %v1523 = vpop.f32.mrb[0].mxu0
        %1524 = vdwg.mxu0
        %v1525 = vmax.f32 %v1286, 1e-24
        %v1526 = vmax.f32 %v1291, 1e-24
        %v1527 = vmax.f32 %v1296, 1e-24
        %v1528 = vmax.f32 %v1301, 1e-24
        %v1529 = vmax.f32 %v1306, 1e-24
        %v1530 = vmax.f32 %v1311, 1e-24
        %v1531 = vmax.f32 %v1316, 1e-24
        %v1532 = vmax.f32 %v1321, 1e-24
        %v1533 = vmax.f32 %v1326, 1e-24
        %v1534 = vmax.f32 %v1331, 1e-24
        %v1535 = vmax.f32 %v1336, 1e-24
        %v1536 = vmax.f32 %v1341, 1e-24
        %v1537 = vmax.f32 %v1346, 1e-24
        %v1538 = vmax.f32 %v1351, 1e-24
        %v1539 = vmax.f32 %v1356, 1e-24
        %v1540 = vmax.f32 %v1361, 1e-24
        %v1541 = vrsqrt.pop %v1525
        %v1542 = vrsqrt.pop %v1526
        %v1543 = vrsqrt.pop %v1527
        %v1544 = vrsqrt.pop %v1528
        %v1545 = vrsqrt.pop %v1529
        %v1546 = vrsqrt.pop %v1530
        %v1547 = vrsqrt.pop %v1531
        %v1548 = vrsqrt.pop %v1532
        %v1549 = vrsqrt.pop %v1533
        %v1550 = vrsqrt.pop %v1534
        %v1551 = vrsqrt.pop %v1535
        %v1552 = vrsqrt.pop %v1536
        %v1553 = vrsqrt.pop %v1537
        %v1554 = vrsqrt.pop %v1538
        %v1555 = vrsqrt.pop %v1539
        %v1556 = vrsqrt.pop %v1540
        %v1557 = vmul.f32 %v1123, %v1541
        %v1558 = vmul.f32 %v1124, %v1542
        %v1559 = vmul.f32 %v1125, %v1543
        %v1560 = vmul.f32 %v1126, %v1544
        %v1561 = vmul.f32 %v1127, %v1545
        %v1562 = vmul.f32 %v1128, %v1546
        %v1563 = vmul.f32 %v1129, %v1547
        %v1564 = vmul.f32 %v1130, %v1548
        %v1565 = vmul.f32 %v1131, %v1549
        %v1566 = vmul.f32 %v1132, %v1550
        %v1567 = vmul.f32 %v1133, %v1551
        %v1568 = vmul.f32 %v1134, %v1552
        %v1569 = vmul.f32 %v1135, %v1553
        %v1570 = vmul.f32 %v1136, %v1554
        %v1571 = vmul.f32 %v1137, %v1555
        %v1572 = vmul.f32 %v1138, %v1556
        %1573 = vst [vmem:[#allocation2] sm:$0xff] %v1557
        %1574 = vst [vmem:[#allocation2 + $0x8] sm:$0xff] %v1558
        %1575 = vst [vmem:[#allocation2 + $0x10] sm:$0xff] %v1559
        %1576 = vst [vmem:[#allocation2 + $0x18] sm:$0xff] %v1560
        %1577 = vst [vmem:[#allocation2 + $0x20] sm:$0xff] %v1561
        %1578 = vst [vmem:[#allocation2 + $0x28] sm:$0xff] %v1562
        %1579 = vst [vmem:[#allocation2 + $0x30] sm:$0xff] %v1563
        %1580 = vst [vmem:[#allocation2 + $0x38] sm:$0xff] %v1564
        %1581 = vst [vmem:[#allocation2 + $0x40] sm:$0xff] %v1565
        %1582 = vst [vmem:[#allocation2 + $0x48] sm:$0xff] %v1566
        %1583 = vst [vmem:[#allocation2 + $0x50] sm:$0xff] %v1567
        %1584 = vst [vmem:[#allocation2 + $0x58] sm:$0xff] %v1568
        %1585 = vst [vmem:[#allocation2 + $0x60] sm:$0xff] %v1569
        %1586 = vst [vmem:[#allocation2 + $0x68] sm:$0xff] %v1570
        %1587 = vst [vmem:[#allocation2 + $0x70] sm:$0xff] %v1571
        %1588 = vst [vmem:[#allocation2 + $0x78] sm:$0xff] %v1572
        %v1589 = vmax.f32 %v1447, 1e-24
        %v1590 = vmax.f32 %v1452, 1e-24
        %v1591 = vmax.f32 %v1457, 1e-24
        %v1592 = vmax.f32 %v1462, 1e-24
        %v1593 = vmax.f32 %v1467, 1e-24
        %v1594 = vmax.f32 %v1472, 1e-24
        %v1595 = vmax.f32 %v1477, 1e-24
        %v1596 = vmax.f32 %v1482, 1e-24
        %v1597 = vmax.f32 %v1487, 1e-24
        %v1598 = vmax.f32 %v1492, 1e-24
        %v1599 = vmax.f32 %v1497, 1e-24
        %v1600 = vmax.f32 %v1502, 1e-24
        %v1601 = vmax.f32 %v1507, 1e-24
        %v1602 = vmax.f32 %v1512, 1e-24
        %v1603 = vmax.f32 %v1517, 1e-24
        %v1604 = vmax.f32 %v1522, 1e-24
        %v1605 = vrsqrt.pop %v1589
        %v1606 = vrsqrt.pop %v1590
        %v1607 = vrsqrt.pop %v1591
        %v1608 = vrsqrt.pop %v1592
        %v1609 = vrsqrt.pop %v1593
        %v1610 = vrsqrt.pop %v1594
        %v1611 = vrsqrt.pop %v1595
        %v1612 = vrsqrt.pop %v1596
        %v1613 = vrsqrt.pop %v1597
        %v1614 = vrsqrt.pop %v1598
        %v1615 = vrsqrt.pop %v1599
        %v1616 = vrsqrt.pop %v1600
        %v1617 = vrsqrt.pop %v1601
        %v1618 = vrsqrt.pop %v1602
        %v1619 = vrsqrt.pop %v1603
        %v1620 = vrsqrt.pop %v1604
        %v1621 = vmul.f32 %v1171, %v1605
        %v1622 = vmul.f32 %v1172, %v1606
        %v1623 = vmul.f32 %v1173, %v1607
        %v1624 = vmul.f32 %v1174, %v1608
        %v1625 = vmul.f32 %v1175, %v1609
        %v1626 = vmul.f32 %v1176, %v1610
        %v1627 = vmul.f32 %v1177, %v1611
        %v1628 = vmul.f32 %v1178, %v1612
        %v1629 = vmul.f32 %v1179, %v1613
        %v1630 = vmul.f32 %v1180, %v1614
        %v1631 = vmul.f32 %v1181, %v1615
        %v1632 = vmul.f32 %v1182, %v1616
        %v1633 = vmul.f32 %v1183, %v1617
        %v1634 = vmul.f32 %v1184, %v1618
        %v1635 = vmul.f32 %v1185, %v1619
        %v1636 = vmul.f32 %v1186, %v1620
        %1637 = vst [vmem:[#allocation3] sm:$0xff] %v1621
        %1638 = vst [vmem:[#allocation3 + $0x8] sm:$0xff] %v1622
        %1639 = vst [vmem:[#allocation3 + $0x10] sm:$0xff] %v1623
        %1640 = vst [vmem:[#allocation3 + $0x18] sm:$0xff] %v1624
        %1641 = vst [vmem:[#allocation3 + $0x20] sm:$0xff] %v1625
        %1642 = vst [vmem:[#allocation3 + $0x28] sm:$0xff] %v1626
        %1643 = vst [vmem:[#allocation3 + $0x30] sm:$0xff] %v1627
        %1644 = vst [vmem:[#allocation3 + $0x38] sm:$0xff] %v1628
        %1645 = vst [vmem:[#allocation3 + $0x40] sm:$0xff] %v1629
        %1646 = vst [vmem:[#allocation3 + $0x48] sm:$0xff] %v1630
        %1647 = vst [vmem:[#allocation3 + $0x50] sm:$0xff] %v1631
        %1648 = vst [vmem:[#allocation3 + $0x58] sm:$0xff] %v1632
        %1649 = vst [vmem:[#allocation3 + $0x60] sm:$0xff] %v1633
        %1650 = vst [vmem:[#allocation3 + $0x68] sm:$0xff] %v1634
        %1651 = vst [vmem:[#allocation3 + $0x70] sm:$0xff] %v1635
        %1652 = vst [vmem:[#allocation3 + $0x78] sm:$0xff] %v1636
        %p1653 = scmp.eq.s32.totalorder %s25, 3
        // Predicated region
        $region53: #{hebbian_rollout.1} parent=47 // pred_check
          %p1654 = pneg %p1653
        $region54: #{hebbian_rollout.1} parent=47 // pred_check_branch
          %1656 = sbr.rel (%p1654) target = $region56
        $region55: #{hebbian_rollout.1} parent=47 // pred_region
          %v1657 = vld [vmem:[#allocation2] sm:$0xff]
          %v1658 = vld [vmem:[#allocation2 + $0x8] sm:$0xff]
          %v1659 = vld [vmem:[#allocation2 + $0x10] sm:$0xff]
          %v1660 = vld [vmem:[#allocation2 + $0x18] sm:$0xff]
          %v1661 = vld [vmem:[#allocation2 + $0x20] sm:$0xff]
          %v1662 = vld [vmem:[#allocation2 + $0x28] sm:$0xff]
          %v1663 = vld [vmem:[#allocation2 + $0x30] sm:$0xff]
          %v1664 = vld [vmem:[#allocation2 + $0x38] sm:$0xff]
          %v1665 = vld [vmem:[#allocation2 + $0x40] sm:$0xff]
          %v1666 = vld [vmem:[#allocation2 + $0x48] sm:$0xff]
          %v1667 = vld [vmem:[#allocation2 + $0x50] sm:$0xff]
          %v1668 = vld [vmem:[#allocation2 + $0x58] sm:$0xff]
          %v1669 = vld [vmem:[#allocation2 + $0x60] sm:$0xff]
          %v1670 = vld [vmem:[#allocation2 + $0x68] sm:$0xff]
          %v1671 = vld [vmem:[#allocation2 + $0x70] sm:$0xff]
          %v1672 = vld [vmem:[#allocation2 + $0x78] sm:$0xff]
          %1673 = vst [vmem:[#allocation7] sm:$0xff] %v1657
          %1674 = vst [vmem:[#allocation7 + $0x8] sm:$0xff] %v1658
          %1675 = vst [vmem:[#allocation7 + $0x10] sm:$0xff] %v1659
          %1676 = vst [vmem:[#allocation7 + $0x18] sm:$0xff] %v1660
          %1677 = vst [vmem:[#allocation7 + $0x20] sm:$0xff] %v1661
          %1678 = vst [vmem:[#allocation7 + $0x28] sm:$0xff] %v1662
          %1679 = vst [vmem:[#allocation7 + $0x30] sm:$0xff] %v1663
          %1680 = vst [vmem:[#allocation7 + $0x38] sm:$0xff] %v1664
          %1681 = vst [vmem:[#allocation7 + $0x40] sm:$0xff] %v1665
          %1682 = vst [vmem:[#allocation7 + $0x48] sm:$0xff] %v1666
          %1683 = vst [vmem:[#allocation7 + $0x50] sm:$0xff] %v1667
          %1684 = vst [vmem:[#allocation7 + $0x58] sm:$0xff] %v1668
          %1685 = vst [vmem:[#allocation7 + $0x60] sm:$0xff] %v1669
          %1686 = vst [vmem:[#allocation7 + $0x68] sm:$0xff] %v1670
          %1687 = vst [vmem:[#allocation7 + $0x70] sm:$0xff] %v1671
          %1688 = vst [vmem:[#allocation7 + $0x78] sm:$0xff] %v1672
          %v1689 = vld [vmem:[#allocation3] sm:$0xff]
          %v1690 = vld [vmem:[#allocation3 + $0x8] sm:$0xff]
          %v1691 = vld [vmem:[#allocation3 + $0x10] sm:$0xff]
          %v1692 = vld [vmem:[#allocation3 + $0x18] sm:$0xff]
          %v1693 = vld [vmem:[#allocation3 + $0x20] sm:$0xff]
          %v1694 = vld [vmem:[#allocation3 + $0x28] sm:$0xff]
          %v1695 = vld [vmem:[#allocation3 + $0x30] sm:$0xff]
          %v1696 = vld [vmem:[#allocation3 + $0x38] sm:$0xff]
          %v1697 = vld [vmem:[#allocation3 + $0x40] sm:$0xff]
          %v1698 = vld [vmem:[#allocation3 + $0x48] sm:$0xff]
          %v1699 = vld [vmem:[#allocation3 + $0x50] sm:$0xff]
          %v1700 = vld [vmem:[#allocation3 + $0x58] sm:$0xff]
          %v1701 = vld [vmem:[#allocation3 + $0x60] sm:$0xff]
          %v1702 = vld [vmem:[#allocation3 + $0x68] sm:$0xff]
          %v1703 = vld [vmem:[#allocation3 + $0x70] sm:$0xff]
          %v1704 = vld [vmem:[#allocation3 + $0x78] sm:$0xff]
          %1705 = vst [vmem:[#allocation9] sm:$0xff] %v1689
          %1706 = vst [vmem:[#allocation9 + $0x8] sm:$0xff] %v1690
          %1707 = vst [vmem:[#allocation9 + $0x10] sm:$0xff] %v1691
          %1708 = vst [vmem:[#allocation9 + $0x18] sm:$0xff] %v1692
          %1709 = vst [vmem:[#allocation9 + $0x20] sm:$0xff] %v1693
          %1710 = vst [vmem:[#allocation9 + $0x28] sm:$0xff] %v1694
          %1711 = vst [vmem:[#allocation9 + $0x30] sm:$0xff] %v1695
          %1712 = vst [vmem:[#allocation9 + $0x38] sm:$0xff] %v1696
          %1713 = vst [vmem:[#allocation9 + $0x40] sm:$0xff] %v1697
          %1714 = vst [vmem:[#allocation9 + $0x48] sm:$0xff] %v1698
          %1715 = vst [vmem:[#allocation9 + $0x50] sm:$0xff] %v1699
          %1716 = vst [vmem:[#allocation9 + $0x58] sm:$0xff] %v1700
          %1717 = vst [vmem:[#allocation9 + $0x60] sm:$0xff] %v1701
          %1718 = vst [vmem:[#allocation9 + $0x68] sm:$0xff] %v1702
          %1719 = vst [vmem:[#allocation9 + $0x70] sm:$0xff] %v1703
          %1720 = vst [vmem:[#allocation9 + $0x78] sm:$0xff] %v1704
        $region56: #{hebbian_rollout.1} parent=47 // pred_fallthru
          _
        %s1721 = sand.u32 %s185, 1
        %s1722 = scalar_lea.sflag [#allocation6], %s1721
        %s1723 = sand.u32 %s185, 1
        %s1724 = smul.addr %s1723, 8
        %s1725 = scalar_lea.vmem [#allocation5], %s1724
        // Predicated region
        $region57: #{hebbian_rollout.1} parent=47 // pred_check
          %p1726 = pneg %p195
        $region58: #{hebbian_rollout.1} parent=47 // pred_check_branch
          %1728 = sbr.rel (%p1726) target = $region60
        $region59: #{hebbian_rollout.1} parent=47 // pred_region
          %s1730 = ssub.s32 128, 128
          %1731 = vsyncadd %s1722, %s1730
          %s1732 = smul.addr %s25, 128
          %s1733 = scalar_lea.hbm %s7, %s1732
          %s1735 = sshll.u32 %s1725, 4
          %s1736 = int_to_ptr.vmem [resolvable:$true] %s1735
          %1738 = dma.vmem_to_hbm [thread:$0]  %s1736, 128, %s1733, %s1722
        $region60: #{hebbian_rollout.1} parent=47 // pred_fallthru
          _
        // Predicated region
        $region61: #{hebbian_rollout.1} parent=47 // pred_check
          %p1739 = pneg %p216
        $region62: #{hebbian_rollout.1} parent=47 // pred_check_branch
          %1741 = sbr.rel (%p1739) target = $region64
        $region63: #{hebbian_rollout.1} parent=47 // pred_region
          %s1743 = ssub.s32 2048, 2048
          %1744 = vsyncadd [#allocation8], %s1743
          %s1745 = sshll.u32 [#allocation7], 4
          %s1746 = int_to_ptr.vmem [resolvable:$true] %s1745
          %1751 = dma.vmem_to_hbm [thread:$0]  %s1746, 2048, %s8, [#allocation8], 128, 128, 8
        $region64: #{hebbian_rollout.1} parent=47 // pred_fallthru
          _
        // Predicated region
        $region65: #{hebbian_rollout.1} parent=47 // pred_check
          %p1752 = pneg %p237
        $region66: #{hebbian_rollout.1} parent=47 // pred_check_branch
          %1754 = sbr.rel (%p1752) target = $region68
        $region67: #{hebbian_rollout.1} parent=47 // pred_region
          %s1756 = ssub.s32 2048, 2048
          %1757 = vsyncadd [#allocation8], %s1756
          %s1758 = sshll.u32 [#allocation9], 4
          %s1759 = int_to_ptr.vmem [resolvable:$true] %s1758
          %1764 = dma.vmem_to_hbm [thread:$0]  %s1759, 2048, %s9, [#allocation8], 128, 128, 8
        $region68: #{hebbian_rollout.1} parent=47 // pred_fallthru
          _
        // Predicated region
        $region69: #{hebbian_rollout.1} parent=47 // pred_check
          %p1765 = pneg %p216
        $region70: #{hebbian_rollout.1} parent=47 // pred_check_branch
          %1767 = sbr.rel (%p1765) target = $region72
        $region71: #{hebbian_rollout.1} parent=47 // pred_region
          %1768 = dma.done [#allocation8], 2048
        $region72: #{hebbian_rollout.1} parent=47 // pred_fallthru
          _
        // Predicated region
        $region73: #{hebbian_rollout.1} parent=47 // pred_check
          %p1769 = pneg %p237
        $region74: #{hebbian_rollout.1} parent=47 // pred_check_branch
          %1771 = sbr.rel (%p1769) target = $region76
        $region75: #{hebbian_rollout.1} parent=47 // pred_region
          %1772 = dma.done [#allocation8], 2048
        $region76: #{hebbian_rollout.1} parent=47 // pred_fallthru
          _
      $region48: #{hebbian_rollout.1} parent=5 // pred_fallthru
        _
      %p1773 = scmp.le.s32.totalorder 2, %s20
      // Predicated region
      $region77: #{hebbian_rollout.1} parent=5 // pred_check
        %p1774 = pneg %p1773
      $region78: #{hebbian_rollout.1} parent=5 // pred_check_branch
        %1776 = sbr.rel (%p1774) target = $region80
      $region79: #{hebbian_rollout.1} parent=5 // pred_region
        %s1777 = ssub.s32 %s20, 2
        // Predicated region
        $region81: #{hebbian_rollout.1} parent=79 // pred_check
          %p1778 = pneg %p201
        $region82: #{hebbian_rollout.1} parent=79 // pred_check_branch
          %1780 = sbr.rel (%p1778) target = $region84
        $region83: #{hebbian_rollout.1} parent=79 // pred_region
          %s1781 = sand.u32 %s186, 1
          %s1782 = scalar_lea.sflag [#allocation6], %s1781
          %s1783 = sand.u32 %s186, 1
          %s1784 = smul.addr %s1783, 8
          %s1785 = scalar_lea.vmem [#allocation5], %s1784
          %1786 = dma.done %s1782, 128
        $region84: #{hebbian_rollout.1} parent=79 // pred_fallthru
          _
      $region80: #{hebbian_rollout.1} parent=5 // pred_fallthru
        _
    $region6: #{hebbian_rollout.1} parent=1 // loop_footer
      %s24 = sadd.s32 1, %s20
    $region7: #{hebbian_rollout.1} parent=1 // loop_footer_branch
      %19 = sbr.rel target = $region3
    $region8: #{hebbian_rollout.1} parent=1 // loop_exit
      _
    %1787 = vsyncpa [#allocation6], 1
    %s1788 = scalar_lea.sflag [#allocation6], 1
    %1789 = vsyncpa %s1788, 1
    %1790 = vsyncpa [#allocation8], 1

</llo_original>
